<compile_context>
chip_gen: v6e
topology: v6e:2x2x1
jax: 0.10.0
libtpu: 0.0.40
codegen_flags: <defaults>
</compile_context>

<pallas_src>
import functools
import math

import numpy as np
import jax
import jax.numpy as jnp
from jax import lax
from jax.experimental import pallas as pl
from jax.experimental.pallas import tpu as pltpu

_MASK_VALUE = -1e30


def _round_up(x, m):
    return (x + m - 1) // m * m


def _pick_tile(total, cap):
    """Largest multiple of 128 <= cap that divides `total` (falls back to total)."""
    cap = max(128, min(cap, total))
    t = (cap // 128) * 128
    while t > 128 and total % t:
        t -= 128
    return t if (t >= 128 and total % t == 0) else total


# ---------------------------------------------------------------------------
# Kernel 1: fused QKV projection   x[N_pad, D] @ [Wq*scale | Wk | Wv][D, 3*inner]
# ---------------------------------------------------------------------------
def _proj_kernel(x_ref, w_ref, o_ref):
    o_ref[...] = jnp.dot(
        x_ref[...], w_ref[...], preferred_element_type=jnp.float32
    ).astype(o_ref.dtype)


def _qkv_proj(x_pad, wqkv, *, tm=512, tn=512):
    n_pad, d = x_pad.shape
    k3 = wqkv.shape[1]
    tm = _pick_tile(n_pad, tm)
    tn = _pick_tile(k3, tn)
    # TODO(synk): for production widths on v7x also tile the contraction (D) axis
    # and set vmem_limit_bytes explicitly; for these dims the (D, tn) weight block
    # is tiny so it is left resident per output-column block.
    return pl.pallas_call(
        _proj_kernel,
        out_shape=jax.ShapeDtypeStruct((n_pad, k3), x_pad.dtype),
        grid_spec=pltpu.PrefetchScalarGridSpec(
            num_scalar_prefetch=0,
            grid=(n_pad // tm, k3 // tn),
            in_specs=[
                pl.BlockSpec((tm, d), lambda i, j: (i, 0)),
                pl.BlockSpec((d, tn), lambda i, j: (0, j)),
            ],
            out_specs=pl.BlockSpec((tm, tn), lambda i, j: (i, j)),
        ),
        compiler_params=pltpu.CompilerParams(
            dimension_semantics=("parallel", "parallel")
        ),
        cost_estimate=pl.CostEstimate(
            flops=2 * n_pad * d * k3,
            transcendentals=0,
            bytes_accessed=(n_pad * d + d * k3 + n_pad * k3) * x_pad.dtype.itemsize,
        ),
    )(x_pad, wqkv)


# ---------------------------------------------------------------------------
# Kernel 2: single ragged flash-attention + output-projection over all segments
# ---------------------------------------------------------------------------
def _ragged_attn_kernel(
    kvstart_ref, kvcount_ref,                     # scalar prefetch (SMEM)
    q_ref, k_ref, v_ref, lo_ref, hi_ref, wo_ref, bo_ref,   # inputs (VMEM)
    o_ref,                                        # output
    m_scr, l_scr, acc_scr, out_scr,               # f32 scratch
    *, kv_tile,
):
    t = pl.program_id(0)
    h = pl.program_id(1)
    ki = pl.program_id(2)
    n_h = pl.num_programs(1)
    n_k = pl.num_programs(2)

    # Zero the cross-head output-projection accumulator at the start of each q tile.
    @pl.when((h == 0) & (ki == 0))
    def _():
        out_scr[...] = jnp.zeros_like(out_scr)

    # Reset the online-softmax state at the start of each (q tile, head).
    @pl.when(ki == 0)
    def _():
        m_scr[...] = jnp.full_like(m_scr, -jnp.inf)
        l_scr[...] = jnp.zeros_like(l_scr)
        acc_scr[...] = jnp.zeros_like(acc_scr)

    count = kvcount_ref[t]

    # Skip kv steps past this q tile's window (DMA is deduped via the clamped
    # index_map, so skipped steps cost neither compute nor fresh HBM traffic).
    @pl.when(ki < count)
    def _():
        start = kvstart_ref[t]
        # q already carries the softmax scale (folded into Wq).
        s = lax.dot_general(
            q_ref[...], k_ref[...], (((1,), (1,)), ((), ())),
            preferred_element_type=jnp.float32,
        )                                                     # (tq, tk) f32
        kv_row = (start + ki) * kv_tile + lax.broadcasted_iota(jnp.int32, s.shape, 1)
        valid = (kv_row >= lo_ref[...]) & (kv_row < hi_ref[...])
        s = jnp.where(valid, s, _MASK_VALUE)

        m_prev = m_scr[...]
        m_new = jnp.maximum(m_prev, s.max(axis=-1, keepdims=True))
        alpha = jnp.exp(m_prev - m_new)
        p = jnp.exp(s - m_new)
        l_scr[...] = alpha * l_scr[...] + p.sum(axis=-1, keepdims=True)
        acc_scr[...] = alpha * acc_scr[...] + jnp.dot(
            p.astype(v_ref.dtype), v_ref[...], preferred_element_type=jnp.float32
        )
        m_scr[...] = m_new

    # Finalize this head: normalize and fold straight into the Wo matmul so the
    # only HBM store stays a single lane-dense [tq, query_dim] tile.
    @pl.when(ki == n_k - 1)
    def _():
        attn = acc_scr[...] * pl.reciprocal(l_scr[...], approx=True)
        out_scr[...] += jnp.dot(
            attn.astype(wo_ref.dtype), wo_ref[...], preferred_element_type=jnp.float32
        )

    @pl.when((h == n_h - 1) & (ki == n_k - 1))
    def _():
        o_ref[...] = (out_scr[...] + bo_ref[...].astype(jnp.float32)).astype(o_ref.dtype)


def _ragged_flash_attention(qkv, lo, hi, kvstart, kvcount, wo, bo, *,
                            heads, tq, tk, n_k_max):
    n_pad, k3 = qkv.shape
    inner = k3 // 3
    dh = inner // heads
    d_out = wo.shape[1]
    n_q = n_pad // tq

    def q_map(t, h, k, start_ref, count_ref):
        return (t, h)

    def k_map(t, h, k, start_ref, count_ref):
        # Clamp to the last valid kv block of this q tile: stays in bounds and the
        # repeated block index lets Pallas elide the DMA for skipped kv steps.
        return (start_ref[t] + jnp.minimum(k, count_ref[t] - 1), heads + h)

    def v_map(t, h, k, start_ref, count_ref):
        return (start_ref[t] + jnp.minimum(k, count_ref[t] - 1), 2 * heads + h)

    def row_map(t, h, k, start_ref, count_ref):
        return (t, 0)

    def wo_map(t, h, k, start_ref, count_ref):
        return (h, 0)

    def bo_map(t, h, k, start_ref, count_ref):
        return (0, 0)

    kernel = functools.partial(_ragged_attn_kernel, kv_tile=tk)
    flops = 4 * heads * n_q * tq * n_k_max * tk * dh + 2 * n_pad * inner * d_out
    return pl.pallas_call(
        kernel,
        out_shape=jax.ShapeDtypeStruct((n_pad, d_out), qkv.dtype),
        grid_spec=pltpu.PrefetchScalarGridSpec(
            num_scalar_prefetch=2,
            grid=(n_q, heads, n_k_max),
            in_specs=[
                pl.BlockSpec((tq, dh), q_map),          # q head-hi columns of the slab
                pl.BlockSpec((tk, dh), k_map),          # k head-hi columns of the slab
                pl.BlockSpec((tk, dh), v_map),          # v head-hi columns of the slab
                pl.BlockSpec((tq, 1), row_map),         # per-row kv lower bound
                pl.BlockSpec((tq, 1), row_map),         # per-row kv upper bound
                pl.BlockSpec((dh, d_out), wo_map),      # Wo rows of head hi
                pl.BlockSpec((1, d_out), bo_map),       # bias
            ],
            out_specs=pl.BlockSpec((tq, d_out), row_map),
            scratch_shapes=[
                pltpu.VMEM((tq, 1), jnp.float32),       # running max
                pltpu.VMEM((tq, 1), jnp.float32),       # running denom
                pltpu.VMEM((tq, dh), jnp.float32),      # per-head attention accumulator
                pltpu.VMEM((tq, d_out), jnp.float32),   # cross-head output-proj accumulator
            ],
        ),
        compiler_params=pltpu.CompilerParams(
            dimension_semantics=("parallel", "arbitrary", "arbitrary")
        ),
        cost_estimate=pl.CostEstimate(
            flops=flops,
            transcendentals=heads * n_q * tq * n_k_max * tk,
            bytes_accessed=(heads * (n_q * tq + 2 * n_q * n_k_max * tk) * dh
                            + inner * d_out + n_pad * d_out) * qkv.dtype.itemsize,
        ),
    )(kvstart, kvcount, qkv, qkv, qkv, lo, hi, wo, bo)


# ---------------------------------------------------------------------------
# Module forward
# ---------------------------------------------------------------------------
def fuse_attention_params(wq, wk, wv, wo, bo, *, heads, dtype=None):
    """Hoisted per-model work: bake the softmax scale into Wq, concat QKV once."""
    dim_head = wq.shape[1] // heads
    scale = dim_head ** -0.5
    wqkv = jnp.concatenate([wq * scale, wk, wv], axis=1)
    if dtype is not None:
        wqkv, wo, bo = wqkv.astype(dtype), wo.astype(dtype), bo.astype(dtype)
    return wqkv, wo, bo


def attention_forward(x, offsets, wqkv, wo, bo, *, heads, tq=256, tk=256, tm_proj=512):
    """x: [N, query_dim] jagged-flattened tokens; offsets: host-side batch offsets."""
    # TODO(synk): the VDBTensor/fvnn jagged container has no JAX equivalent; the
    # host-side offsets stand in for q.data.joffsets, but all segments run in a
    # single pallas_call (schedule tables are scalar-prefetched, not baked in).
    offsets = np.asarray(offsets, dtype=np.int64)
    n = int(offsets[-1])
    d = x.shape[1]
    k3 = wqkv.shape[1]
    inner = k3 // 3
    dh = inner // heads
    d_out = wo.shape[1]

    x = x.astype(wqkv.dtype)

    tq = max(128, min(tq, _round_up(n, 128)))
    tk = max(128, min(tk, _round_up(n, 128)))
    n_pad = _round_up(n, math.lcm(tq, tk))
    if n_pad != n:
        x = jnp.pad(x, ((0, n_pad - n), (0, 0)))      # only end-of-array padding

    # Host-side schedule: per-row segment bounds + per-q-tile kv block windows.
    lo = np.zeros(n_pad, np.int32)
    hi = np.zeros(n_pad, np.int32)
    for b in range(len(offsets) - 1):
        s, e = int(offsets[b]), int(offsets[b + 1])
        lo[s:e] = s
        hi[s:e] = e
    n_q = n_pad // tq
    kvstart = np.zeros(n_q, np.int32)
    kvcount = np.ones(n_q, np.int32)
    for t in range(n_q):
        r0, r1 = t * tq, min(t * tq + tq, n)
        if r1 <= r0:
            continue                                   # fully padded trailing tile
        blk0 = int(lo[r0]) // tk
        blk1 = -(-int(hi[r1 - 1]) // tk)
        kvstart[t] = blk0
        kvcount[t] = max(1, blk1 - blk0)
    n_k_max = int(kvcount.max())

    lo_d = jnp.asarray(lo).reshape(n_pad, 1)
    hi_d = jnp.asarray(hi).reshape(n_pad, 1)
    kvstart_d = jnp.asarray(kvstart)
    kvcount_d = jnp.asarray(kvcount)

    # Fused QKV projection writes the padded slab directly (padding rows are zero).
    qkv = _qkv_proj(x, wqkv, tm=tm_proj)

    out = _ragged_flash_attention(
        qkv, lo_d, hi_d, kvstart_d, kvcount_d, wo, bo,
        heads=heads, tq=tq, tk=tk, n_k_max=n_k_max,
    )
    return out[:n]


# ---------------------------------------------------------------------------
# Pure-JAX reference
# ---------------------------------------------------------------------------
def attention_ref(x, offsets, wq, wk, wv, wo, bo, *, heads):
    q, k, v = x @ wq, x @ wk, x @ wv
    dh = wq.shape[1] // heads
    outs = []
    for b in range(len(offsets) - 1):
        s, e = int(offsets[b]), int(offsets[b + 1])
        if e == s:
            continue
        def split(t):
            return t[s:e].reshape(e - s, heads, dh).transpose(1, 0, 2)
        qb, kb, vb = split(q), split(k), split(v)
        scores = jnp.einsum("hqd,hkd->hqk", qb, kb) * dh ** -0.5
        p = jax.nn.softmax(scores, axis=-1)
        ob = jnp.einsum("hqk,hkd->hqd", p, vb)
        outs.append(ob.transpose(1, 0, 2).reshape(e - s, heads * dh))
    return jnp.concatenate(outs, axis=0) @ wo + bo


if __name__ == "__main__":
    # Small but lane-dense config: all feature dims multiples of 128.
    heads, dim_head = 2, 128          # inner_dim = 256
    query_dim = 128
    inner = heads * dim_head
    offsets = (0, 200, 512)           # jagged batches with non-tile-aligned lengths
    n_tokens = offsets[-1]

    key = jax.random.PRNGKey(0)
    kx, kq, kk, kv_, ko, kb = jax.random.split(key, 6)
    x = jax.random.normal(kx, (n_tokens, query_dim), dtype=jnp.float32)
    sq = 1.0 / math.sqrt(query_dim)
    wq = jax.random.uniform(kq, (query_dim, inner), jnp.float32, -sq, sq)
    wk = jax.random.uniform(kk, (query_dim, inner), jnp.float32, -sq, sq)
    wv = jax.random.uniform(kv_, (query_dim, inner), jnp.float32, -sq, sq)
    so = 1.0 / math.sqrt(inner)
    wo = jax.random.uniform(ko, (inner, query_dim), jnp.float32, -so, so)
    bo = jax.random.uniform(kb, (1, query_dim), jnp.float32, -so, so)

    ref = attention_ref(x, offsets, wq, wk, wv, wo, bo, heads=heads)

    # f32 operand run (tight reference check).
    p32 = fuse_attention_params(wq, wk, wv, wo, bo, heads=heads)
    out32 = attention_forward(x, offsets, *p32, heads=heads, tq=256, tk=256, tm_proj=512)
    jax.block_until_ready(out32)
    assert out32.shape == (n_tokens, query_dim)
    err32 = float(jnp.max(jnp.abs(out32 - ref)))
    assert err32 < 2e-3, f"f32 mismatch vs reference (max abs err {err32})"

    # bf16 MXU-operand run (v6e/v7x perf path); accumulation stays f32.
    p16 = fuse_attention_params(wq, wk, wv, wo, bo, heads=heads, dtype=jnp.bfloat16)
    out16 = attention_forward(x, offsets, *p16, heads=heads, tq=256, tk=256, tm_proj=512)
    jax.block_until_ready(out16)
    err16 = float(jnp.max(jnp.abs(out16.astype(jnp.float32) - ref)))
    assert err16 < 6e-2, f"bf16 mismatch vs reference (max abs err {err16})"

    print("KERNEL_OK")
</pallas_src>

<mosaic_0001>
module attributes {stable_mosaic.version = 11 : i64} {
  func.func @_proj_kernel(%arg0: i32, %arg1: i32, %arg2: memref<512x128xf32, #tpu.memory_space<vmem>>, %arg3: memref<128x384xf32, #tpu.memory_space<vmem>>, %arg4: memref<512x384xf32, #tpu.memory_space<vmem>>) attributes {dimension_semantics = [#tpu.dimension_semantics<parallel>, #tpu.dimension_semantics<parallel>], iteration_bounds = array<i64: 1, 2>, scalar_prefetch = 0 : i64, scratch_operands = 0 : i64, tpu.core_type = #tpu.core_type<tc>, window_params = [{transform_indices = @transform_0, window_bounds = array<i64: 512, 128>}, {transform_indices = @transform_1, window_bounds = array<i64: 128, 384>}, {transform_indices = @transform_2, window_bounds = array<i64: 512, 384>}]} {
    %c0 = arith.constant 0 : index
    %c0_0 = arith.constant 0 : index
    %0 = vector.load %arg2[%c0, %c0_0] : memref<512x128xf32, #tpu.memory_space<vmem>>, vector<512x128xf32>
    %c0_1 = arith.constant 0 : index
    %c0_2 = arith.constant 0 : index
    %1 = vector.load %arg3[%c0_1, %c0_2] : memref<128x384xf32, #tpu.memory_space<vmem>>, vector<128x384xf32>
    %cst = arith.constant dense<0.000000e+00> : vector<512x384xf32>
    %2 = tpu.matmul %0, %1, %cst {dimension_numbers = #tpu.dot_dimension_numbers<[1], [0], [0], [1], [0, 0, 1, 1], [], []>} : vector<512x128xf32>, vector<128x384xf32>, vector<512x384xf32> -> vector<512x384xf32>
    %c0_3 = arith.constant 0 : index
    %c0_4 = arith.constant 0 : index
    %3 = vector.load %arg4[%c0_3, %c0_4] : memref<512x384xf32, #tpu.memory_space<vmem>>, vector<512x384xf32>
    tpu.vector_store %arg4[%c0_3, %c0_4], %2 {strides = array<i32>} : memref<512x384xf32, #tpu.memory_space<vmem>>, vector<512x384xf32>,
    return
  }
  func.func @transform_0(%arg0: i32, %arg1: i32) -> (i32, i32) {
    %c0_i32 = arith.constant 0 : i32
    %c0_i32_0 = arith.constant 0 : i32
    return %arg0, %c0_i32 : i32, i32
  }
  func.func @transform_1(%arg0: i32, %arg1: i32) -> (i32, i32) {
    %c0_i32 = arith.constant 0 : i32
    %c0_i32_0 = arith.constant 0 : i32
    return %c0_i32, %arg1 : i32, i32
  }
  func.func @transform_2(%arg0: i32, %arg1: i32) -> (i32, i32) {
    %c0_i32 = arith.constant 0 : i32
    return %arg0, %arg1 : i32, i32
  }
}

</mosaic_0001>

<llo_original>
// kernel: tpu_custom_call.1
$region0: #{tpu_custom_call.1}
  #allocation0 [shape = 'u32[]', space=smem, size = 0x4, offset = 0x4, fixed_abs, tag = 'smem constant byte address 0x4 - core index']
  #allocation1 [shape = 'u32[144,128]{1,0:T(1,128)}', space=vmem, size = 0x12000, scoped, tag = 'internal scratch']
  %s0 = inlined_call_operand.hbm [shape: f32[512,128], index: 0, kind: input, shape index: {}]
  %s1 = inlined_call_operand.hbm [shape: f32[128,768], index: 1, kind: input, shape index: {}]
  %s2 = inlined_call_operand.hbm [shape: f32[512,768], index: 2, kind: output, shape index: {}]
  %s3 = sld [smem:[#allocation0]]
  $region49: #{tpu_custom_call.1} parent=0
    _
  %s5 = ssub.s32 1, %s3
  %s6 = scalar_select 0, %s5, %s3
  $region1: #{tpu_custom_call.1} parent=0
    #allocation2 [shape = 'u8[262144]{0}', space=vmem, size = 0x40000, scoped, tag = 'input window, operand 0, single buffered']
    #allocation3 [shape = 's32[2]{0}', space=sflag, size = 0x8, scoped, tag = 'scoped memory for tpu_custom_call.1']
    #allocation4 [shape = 's32[2]{0}', space=sflag, size = 0x8, scoped, tag = 'scoped memory for tpu_custom_call.1']
    #allocation5 [shape = 'u8[393216]{0}', space=vmem, size = 0x60000, scoped, tag = 'input window, operand 1']
    #allocation6 [shape = 's32[2]{0}', space=sflag, size = 0x8, scoped, tag = 'scoped memory for tpu_custom_call.1']
    #allocation7 [shape = 'u8[1572864]{0}', space=vmem, size = 0x180000, scoped, tag = 'output window, operand 0']
    %7 = vsyncpa [#allocation3], 0
    %8 = vsyncpa [#allocation6], 0
    %s9 = scalar_lea.sflag [#allocation6], 1
    %10 = vsyncpa %s9, 0
    %11 = vsyncpa [#allocation4], 0
    %s12 = scalar_lea.sflag [#allocation4], 1
    %13 = vsyncpa %s12, 0
    loop: start=0, step=1, limit=4
    $region2: #{tpu_custom_call.1} parent=1 // loop_pre_header
      _
    $region3: #{tpu_custom_call.1} parent=1 // loop_header
      %s15 = sphi 0, %s19
      %p16 = scmp.ge.s32.totalorder %s15, 4
      %s22 = sphi 0, %s34
      %s23 = sphi 0, %s30
      %s24 = sphi 0, %s22
      %s25 = sphi 0, %s23
      %s26 = sphi 0, %s24
      %s27 = sphi 0, %s25
      %s37 = sphi 0, %s39
      %s40 = sphi 0, %s37
      %s41 = sphi 0, %s40
      %s57 = sphi 0, %s41
      %s63 = sphi 0, %s65
      %s66 = sphi 0, %s63
      %s67 = sphi 0, %s66
      %s83 = sphi 0, %s67
      %s91 = sphi 0, %s93
      %s94 = sphi 0, %s91
      %s95 = sphi 0, %s94
      %s111 = sphi 0, %s95
    $region4: #{tpu_custom_call.1} parent=1 // loop_header_branch
      %18 = sbr.rel (%p16) target = $region8
    $region5: #{tpu_custom_call.1} parent=1 // loop_body
      %s20 = ssub.s32 %s15, 1
      %s21 = ssub.s32 %s15, 2
      %s28 = sadd.s32 1, %s23
      %p29 = scmp.ge.s32.totalorder %s28, 2
      %s30 = scalar_select %p29, 0, %s28
      %s31 = sadd.s32 1, %s22
      %s32 = scalar_select %p29, %s31, %s22
      %p33 = scmp.ge.s32.totalorder %s32, 1
      %s34 = scalar_select %p33, 0, %s32
      %s35 = ssub.s32 %s22, %s34
      %p36 = scmp.eq.s32.totalorder %s35, 0
      %s38 = sadd.s32 %s37, 1
      %s39 = scalar_select %p36, %s37, %s38
      %p42 = pneg %p36
      %p43 = scmp.eq.s32.totalorder %s15, 1
      %p44 = por %p42, %p43
      %p45 = scmp.ne.s32.totalorder %s37, %s40
      %p46 = scmp.eq.s32.totalorder %s15, 0
      %p47 = por %p45, %p46
      %p48 = scmp.ne.s32.totalorder %s37, %s40
      %p49 = scmp.eq.s32.totalorder %s20, 1
      %p50 = por %p48, %p49
      %p51 = scmp.ne.s32.totalorder %s40, %s41
      %p52 = scmp.eq.s32.totalorder %s20, 0
      %p53 = por %p51, %p52
      %p54 = scmp.ne.s32.totalorder %s40, %s41
      %p55 = scmp.eq.s32.totalorder %s21, 1
      %p56 = por %p54, %p55
      %p58 = scmp.ne.s32.totalorder %s41, %s57
      %p59 = scmp.eq.s32.totalorder %s21, 0
      %p60 = por %p58, %p59
      %s61 = ssub.s32 %s23, %s30
      %p62 = scmp.eq.s32.totalorder %s61, 0
      %s64 = sadd.s32 %s63, 1
      %s65 = scalar_select %p62, %s63, %s64
      %p68 = pneg %p62
      %p69 = scmp.eq.s32.totalorder %s15, 1
      %p70 = por %p68, %p69
      %p71 = scmp.ne.s32.totalorder %s63, %s66
      %p72 = scmp.eq.s32.totalorder %s15, 0
      %p73 = por %p71, %p72
      %p74 = scmp.ne.s32.totalorder %s63, %s66
      %p75 = scmp.eq.s32.totalorder %s20, 1
      %p76 = por %p74, %p75
      %p77 = scmp.ne.s32.totalorder %s66, %s67
      %p78 = scmp.eq.s32.totalorder %s20, 0
      %p79 = por %p77, %p78
      %p80 = scmp.ne.s32.totalorder %s66, %s67
      %p81 = scmp.eq.s32.totalorder %s21, 1
      %p82 = por %p80, %p81
      %p84 = scmp.ne.s32.totalorder %s67, %s83
      %p85 = scmp.eq.s32.totalorder %s21, 0
      %p86 = por %p84, %p85
      %s87 = ssub.s32 %s22, %s34
      %s88 = ssub.s32 %s23, %s30
      %s89 = sor.u32 %s87, %s88
      %p90 = scmp.eq.s32.totalorder %s89, 0
      %s92 = sadd.s32 %s91, 1
      %s93 = scalar_select %p90, %s91, %s92
      %p96 = pneg %p90
      %p97 = scmp.eq.s32.totalorder %s15, 1
      %p98 = por %p96, %p97
      %p99 = scmp.ne.s32.totalorder %s91, %s94
      %p100 = scmp.eq.s32.totalorder %s15, 0
      %p101 = por %p99, %p100
      %p102 = scmp.ne.s32.totalorder %s91, %s94
      %p103 = scmp.eq.s32.totalorder %s20, 1
      %p104 = por %p102, %p103
      %p105 = scmp.ne.s32.totalorder %s94, %s95
      %p106 = scmp.eq.s32.totalorder %s20, 0
      %p107 = por %p105, %p106
      %p108 = scmp.ne.s32.totalorder %s94, %s95
      %p109 = scmp.eq.s32.totalorder %s21, 1
      %p110 = por %p108, %p109
      %p112 = scmp.ne.s32.totalorder %s95, %s111
      %p113 = scmp.eq.s32.totalorder %s21, 0
      %p114 = por %p112, %p113
      %p115 = scmp.le.s32.totalorder 1, %s15
      %p116 = scmp.lt.s32.totalorder %s15, 3
      %p117 = pnand %p115, %p116
      %p118 = pneg %p117
      // Predicated region
      $region9: #{tpu_custom_call.1} parent=5 // pred_check
        _
      $region10: #{tpu_custom_call.1} parent=5 // pred_check_branch
        %120 = sbr.rel (%p117) target = $region12
      $region11: #{tpu_custom_call.1} parent=5 // pred_region
        %s121 = ssub.s32 %s15, 1
        // Predicated region
        $region13: #{tpu_custom_call.1} parent=11 // pred_check
          %p122 = pneg %p53
        $region14: #{tpu_custom_call.1} parent=11 // pred_check_branch
          %124 = sbr.rel (%p122) target = $region16
        $region15: #{tpu_custom_call.1} parent=11 // pred_region
          %s125 = smul.u32 64, %s24
          %s127 = ssub.s32 8192, 8192
          %128 = vsyncadd [#allocation3], %s127
          %s129 = smul.addr %s125, 128
          %s130 = scalar_lea.hbm %s0, %s129
          %s131 = sshll.u32 [#allocation2], 4
          %s132 = int_to_ptr.vmem [resolvable:$true] %s131
          %137 = dma.hbm_to_vmem [thread:$0]  %s130, 8192, %s132, [#allocation3], 128, 128, 8
        $region16: #{tpu_custom_call.1} parent=11 // pred_fallthru
          _
      $region12: #{tpu_custom_call.1} parent=5 // pred_fallthru
        _
      %p138 = scmp.lt.s32.totalorder %s15, 2
      // Predicated region
      $region17: #{tpu_custom_call.1} parent=5 // pred_check
        %p139 = pneg %p138
      $region18: #{tpu_custom_call.1} parent=5 // pred_check_branch
        %141 = sbr.rel (%p139) target = $region20
      $region19: #{tpu_custom_call.1} parent=5 // pred_region
        // Predicated region
        $region21: #{tpu_custom_call.1} parent=19 // pred_check
          %p142 = pneg %p73
        $region22: #{tpu_custom_call.1} parent=19 // pred_check_branch
          %144 = sbr.rel (%p142) target = $region24
        $region23: #{tpu_custom_call.1} parent=19 // pred_region
          %s145 = sand.u32 %s63, 1
          %s146 = scalar_lea.sflag [#allocation6], %s145
          %s147 = sand.u32 %s63, 1
          %s148 = smul.addr %s147, 384
          %s149 = scalar_lea.vmem [#allocation5], %s148
          %s150 = smul.u32 3, %s23
          %s152 = ssub.s32 6144, 6144
          %153 = vsyncadd %s146, %s152
          %s154 = smul.addr %s150, 128
          %s155 = scalar_lea.hbm %s1, %s154
          %s156 = sshll.u32 %s149, 4
          %s157 = int_to_ptr.vmem [resolvable:$true] %s156
          %162 = dma.hbm_to_vmem [thread:$0]  %s155, 6144, %s157, %s146, 768, 384, 24
        $region24: #{tpu_custom_call.1} parent=19 // pred_fallthru
          _
      $region20: #{tpu_custom_call.1} parent=5 // pred_fallthru
        _
      %p163 = scmp.le.s32.totalorder 1, %s15
      %p164 = scmp.lt.s32.totalorder %s15, 3
      %p165 = pnand %p163, %p164
      %p166 = pneg %p165
      // Predicated region
      $region25: #{tpu_custom_call.1} parent=5 // pred_check
        _
      $region26: #{tpu_custom_call.1} parent=5 // pred_check_branch
        %168 = sbr.rel (%p165) target = $region28
      $region27: #{tpu_custom_call.1} parent=5 // pred_region
        %s169 = ssub.s32 %s15, 1
        // Predicated region
        $region29: #{tpu_custom_call.1} parent=27 // pred_check
          %p170 = pneg %p53
        $region30: #{tpu_custom_call.1} parent=27 // pred_check_branch
          %172 = sbr.rel (%p170) target = $region32
        $region31: #{tpu_custom_call.1} parent=27 // pred_region
          %173 = dma.done [#allocation3], 8192
        $region32: #{tpu_custom_call.1} parent=27 // pred_fallthru
          _
        %s174 = sand.u32 %s66, 1
        %s175 = scalar_lea.sflag [#allocation6], %s174
        %s176 = sand.u32 %s66, 1
        %s177 = smul.addr %s176, 384
        %s178 = scalar_lea.vmem [#allocation5], %s177
        // Predicated region
        $region33: #{tpu_custom_call.1} parent=27 // pred_check
          %p179 = pneg %p79
        $region34: #{tpu_custom_call.1} parent=27 // pred_check_branch
          %181 = sbr.rel (%p179) target = $region36
        $region35: #{tpu_custom_call.1} parent=27 // pred_region
          %182 = dma.done %s175, 6144
        $region36: #{tpu_custom_call.1} parent=27 // pred_fallthru
          _
        %p183 = pneg %p53
        %p184 = pneg %p50
        %s185 = sand.u32 %s66, 1
        %s186 = scalar_lea.sflag [#allocation6], %s185
        %s187 = sand.u32 %s66, 1
        %s188 = smul.addr %s187, 384
        %s189 = scalar_lea.vmem [#allocation5], %s188
        %p190 = pneg %p79
        %p191 = pneg %p76
        %p192 = pneg %p107
        %p193 = pneg %p104
        %s194 = sand.u32 %s94, 1
        %s195 = scalar_lea.sflag [#allocation4], %s194
        %s196 = sand.u32 %s94, 1
        %s197 = smul.addr %s196, 1536
        %s198 = scalar_lea.vmem [#allocation7], %s197
        %s199 = smul.u32 64, %s24
        %s200 = smul.u32 3, %s25
        %s201 = smul.u32 64, %s24
        %s202 = smul.u32 3, %s25
        %v203 = vld [vmem:[#allocation2] sm:$0xff]
        %v204 = vld [vmem:[#allocation2 + $0x8] sm:$0xff]
        %v205 = vld [vmem:[#allocation2 + $0x10] sm:$0xff]
        %v206 = vld [vmem:[#allocation2 + $0x18] sm:$0xff]
        %v207 = vld [vmem:[#allocation2 + $0x20] sm:$0xff]
        %v208 = vld [vmem:[#allocation2 + $0x28] sm:$0xff]
        %v209 = vld [vmem:[#allocation2 + $0x30] sm:$0xff]
        %v210 = vld [vmem:[#allocation2 + $0x38] sm:$0xff]
        %v211 = vld [vmem:[#allocation2 + $0x40] sm:$0xff]
        %v212 = vld [vmem:[#allocation2 + $0x48] sm:$0xff]
        %v213 = vld [vmem:[#allocation2 + $0x50] sm:$0xff]
        %v214 = vld [vmem:[#allocation2 + $0x58] sm:$0xff]
        %v215 = vld [vmem:[#allocation2 + $0x60] sm:$0xff]
        %v216 = vld [vmem:[#allocation2 + $0x68] sm:$0xff]
        %v217 = vld [vmem:[#allocation2 + $0x70] sm:$0xff]
        %v218 = vld [vmem:[#allocation2 + $0x78] sm:$0xff]
        %v219 = vld [vmem:[#allocation2 + $0x80] sm:$0xff]
        %v220 = vld [vmem:[#allocation2 + $0x88] sm:$0xff]
        %v221 = vld [vmem:[#allocation2 + $0x90] sm:$0xff]
        %v222 = vld [vmem:[#allocation2 + $0x98] sm:$0xff]
        %v223 = vld [vmem:[#allocation2 + $0xa0] sm:$0xff]
        %v224 = vld [vmem:[#allocation2 + $0xa8] sm:$0xff]
        %v225 = vld [vmem:[#allocation2 + $0xb0] sm:$0xff]
        %v226 = vld [vmem:[#allocation2 + $0xb8] sm:$0xff]
        %v227 = vld [vmem:[#allocation2 + $0xc0] sm:$0xff]
        %v228 = vld [vmem:[#allocation2 + $0xc8] sm:$0xff]
        %v229 = vld [vmem:[#allocation2 + $0xd0] sm:$0xff]
        %v230 = vld [vmem:[#allocation2 + $0xd8] sm:$0xff]
        %v231 = vld [vmem:[#allocation2 + $0xe0] sm:$0xff]
        %v232 = vld [vmem:[#allocation2 + $0xe8] sm:$0xff]
        %v233 = vld [vmem:[#allocation2 + $0xf0] sm:$0xff]
        %v234 = vld [vmem:[#allocation2 + $0xf8] sm:$0xff]
        %v235 = vld [vmem:[#allocation2 + $0x100] sm:$0xff]
        %v236 = vld [vmem:[#allocation2 + $0x108] sm:$0xff]
        %v237 = vld [vmem:[#allocation2 + $0x110] sm:$0xff]
        %v238 = vld [vmem:[#allocation2 + $0x118] sm:$0xff]
        %v239 = vld [vmem:[#allocation2 + $0x120] sm:$0xff]
        %v240 = vld [vmem:[#allocation2 + $0x128] sm:$0xff]
        %v241 = vld [vmem:[#allocation2 + $0x130] sm:$0xff]
        %v242 = vld [vmem:[#allocation2 + $0x138] sm:$0xff]
        %v243 = vld [vmem:[#allocation2 + $0x140] sm:$0xff]
        %v244 = vld [vmem:[#allocation2 + $0x148] sm:$0xff]
        %v245 = vld [vmem:[#allocation2 + $0x150] sm:$0xff]
        %v246 = vld [vmem:[#allocation2 + $0x158] sm:$0xff]
        %v247 = vld [vmem:[#allocation2 + $0x160] sm:$0xff]
        %v248 = vld [vmem:[#allocation2 + $0x168] sm:$0xff]
        %v249 = vld [vmem:[#allocation2 + $0x170] sm:$0xff]
        %v250 = vld [vmem:[#allocation2 + $0x178] sm:$0xff]
        %v251 = vld [vmem:[#allocation2 + $0x180] sm:$0xff]
        %v252 = vld [vmem:[#allocation2 + $0x188] sm:$0xff]
        %v253 = vld [vmem:[#allocation2 + $0x190] sm:$0xff]
        %v254 = vld [vmem:[#allocation2 + $0x198] sm:$0xff]
        %v255 = vld [vmem:[#allocation2 + $0x1a0] sm:$0xff]
        %v256 = vld [vmem:[#allocation2 + $0x1a8] sm:$0xff]
        %v257 = vld [vmem:[#allocation2 + $0x1b0] sm:$0xff]
        %v258 = vld [vmem:[#allocation2 + $0x1b8] sm:$0xff]
        %v259 = vld [vmem:[#allocation2 + $0x1c0] sm:$0xff]
        %v260 = vld [vmem:[#allocation2 + $0x1c8] sm:$0xff]
        %v261 = vld [vmem:[#allocation2 + $0x1d0] sm:$0xff]
        %v262 = vld [vmem:[#allocation2 + $0x1d8] sm:$0xff]
        %v263 = vld [vmem:[#allocation2 + $0x1e0] sm:$0xff]
        %v264 = vld [vmem:[#allocation2 + $0x1e8] sm:$0xff]
        %v265 = vld [vmem:[#allocation2 + $0x1f0] sm:$0xff]
        %v266 = vld [vmem:[#allocation2 + $0x1f8] sm:$0xff]
        %v267 = vld [vmem:[%s178] sm:$0xff]
        %v268 = vld [vmem:[%s178 + $0x8] sm:$0xff]
        %v269 = vld [vmem:[%s178 + $0x10] sm:$0xff]
        %v270 = vld [vmem:[%s178 + $0x18] sm:$0xff]
        %v271 = vld [vmem:[%s178 + $0x20] sm:$0xff]
        %v272 = vld [vmem:[%s178 + $0x28] sm:$0xff]
        %v273 = vld [vmem:[%s178 + $0x30] sm:$0xff]
        %v274 = vld [vmem:[%s178 + $0x38] sm:$0xff]
        %v275 = vld [vmem:[%s178 + $0x40] sm:$0xff]
        %v276 = vld [vmem:[%s178 + $0x48] sm:$0xff]
        %v277 = vld [vmem:[%s178 + $0x50] sm:$0xff]
        %v278 = vld [vmem:[%s178 + $0x58] sm:$0xff]
        %v279 = vld [vmem:[%s178 + $0x60] sm:$0xff]
        %v280 = vld [vmem:[%s178 + $0x68] sm:$0xff]
        %v281 = vld [vmem:[%s178 + $0x70] sm:$0xff]
        %v282 = vld [vmem:[%s178 + $0x78] sm:$0xff]
        %v283 = vld [vmem:[%s178 + $0x80] sm:$0xff]
        %v284 = vld [vmem:[%s178 + $0x88] sm:$0xff]
        %v285 = vld [vmem:[%s178 + $0x90] sm:$0xff]
        %v286 = vld [vmem:[%s178 + $0x98] sm:$0xff]
        %v287 = vld [vmem:[%s178 + $0xa0] sm:$0xff]
        %v288 = vld [vmem:[%s178 + $0xa8] sm:$0xff]
        %v289 = vld [vmem:[%s178 + $0xb0] sm:$0xff]
        %v290 = vld [vmem:[%s178 + $0xb8] sm:$0xff]
        %v291 = vld [vmem:[%s178 + $0xc0] sm:$0xff]
        %v292 = vld [vmem:[%s178 + $0xc8] sm:$0xff]
        %v293 = vld [vmem:[%s178 + $0xd0] sm:$0xff]
        %v294 = vld [vmem:[%s178 + $0xd8] sm:$0xff]
        %v295 = vld [vmem:[%s178 + $0xe0] sm:$0xff]
        %v296 = vld [vmem:[%s178 + $0xe8] sm:$0xff]
        %v297 = vld [vmem:[%s178 + $0xf0] sm:$0xff]
        %v298 = vld [vmem:[%s178 + $0xf8] sm:$0xff]
        %v299 = vld [vmem:[%s178 + $0x100] sm:$0xff]
        %v300 = vld [vmem:[%s178 + $0x108] sm:$0xff]
        %v301 = vld [vmem:[%s178 + $0x110] sm:$0xff]
        %v302 = vld [vmem:[%s178 + $0x118] sm:$0xff]
        %v303 = vld [vmem:[%s178 + $0x120] sm:$0xff]
        %v304 = vld [vmem:[%s178 + $0x128] sm:$0xff]
        %v305 = vld [vmem:[%s178 + $0x130] sm:$0xff]
        %v306 = vld [vmem:[%s178 + $0x138] sm:$0xff]
        %v307 = vld [vmem:[%s178 + $0x140] sm:$0xff]
        %v308 = vld [vmem:[%s178 + $0x148] sm:$0xff]
        %v309 = vld [vmem:[%s178 + $0x150] sm:$0xff]
        %v310 = vld [vmem:[%s178 + $0x158] sm:$0xff]
        %v311 = vld [vmem:[%s178 + $0x160] sm:$0xff]
        %v312 = vld [vmem:[%s178 + $0x168] sm:$0xff]
        %v313 = vld [vmem:[%s178 + $0x170] sm:$0xff]
        %v314 = vld [vmem:[%s178 + $0x178] sm:$0xff]
        %315 = vmatprep.subr.mxu0 %v313
        %316 = vmatpush1.msra.mxu0 %v312
        %317 = vmatprep.subr.mxu0 %v310
        %318 = vmatpush1.msra.mxu0 %v309
        %319 = vmatprep.subr.mxu0 %v307
        %320 = vmatpush1.msra.mxu0 %v306
        %321 = vmatprep.subr.mxu0 %v304
        %322 = vmatpush1.msra.mxu0 %v303
        %323 = vmatprep.subr.mxu0 %v301
        %324 = vmatpush1.msra.mxu0 %v300
        %325 = vmatprep.subr.mxu0 %v298
        %326 = vmatpush1.msra.mxu0 %v297
        %327 = vmatprep.subr.mxu0 %v295
        %328 = vmatpush1.msra.mxu0 %v294
        %329 = vmatprep.subr.mxu0 %v292
        %330 = vmatpush1.msra.mxu0 %v291
        %331 = vmatprep.subr.mxu0 %v289
        %332 = vmatpush1.msra.mxu0 %v288
        %333 = vmatprep.subr.mxu0 %v286
        %334 = vmatpush1.msra.mxu0 %v285
        %335 = vmatprep.subr.mxu0 %v283
        %336 = vmatpush1.msra.mxu0 %v282
        %337 = vmatprep.subr.mxu0 %v280
        %338 = vmatpush1.msra.mxu0 %v279
        %339 = vmatprep.subr.mxu0 %v277
        %340 = vmatpush1.msra.mxu0 %v276
        %341 = vmatprep.subr.mxu0 %v274
        %342 = vmatpush1.msra.mxu0 %v273
        %343 = vmatprep.subr.mxu0 %v271
        %344 = vmatpush1.msra.mxu0 %v270
        %345 = vmatprep.subr.mxu0 %v268
        %346 = vmatpush1.msra.mxu0 %v267
        %347 = vmatprep.subr.mxu0 0.0
        %348 = vmatpush2.msra.mxu0 0.0
        %349 = vmatprep.subr.mxu0 0.0
        %350 = vmatpush2.msra.mxu0 0.0
        %351 = vmatprep.subr.mxu0 0.0
        %352 = vmatpush2.msra.mxu0 0.0
        %353 = vmatprep.subr.mxu0 0.0
        %354 = vmatpush2.msra.mxu0 0.0
        %355 = vmatprep.subr.mxu0 0.0
        %356 = vmatpush2.msra.mxu0 0.0
        %357 = vmatprep.subr.mxu0 0.0
        %358 = vmatpush2.msra.mxu0 0.0
        %359 = vmatprep.subr.mxu0 0.0
        %360 = vmatpush2.msra.mxu0 0.0
        %361 = vmatprep.subr.mxu0 0.0
        %362 = vmatpush2.msra.mxu0 0.0
        %363 = vmatprep.subr.mxu0 0.0
        %364 = vmatpush2.msra.mxu0 0.0
        %365 = vmatprep.subr.mxu0 0.0
        %366 = vmatpush2.msra.mxu0 0.0
        %367 = vmatprep.subr.mxu0 0.0
        %368 = vmatpush2.msra.mxu0 0.0
        %369 = vmatprep.subr.mxu0 0.0
        %370 = vmatpush2.msra.mxu0 0.0
        %371 = vmatprep.subr.mxu0 0.0
        %372 = vmatpush2.msra.mxu0 0.0
        %373 = vmatprep.subr.mxu0 0.0
        %374 = vmatpush2.msra.mxu0 0.0
        %375 = vmatprep.subr.mxu0 0.0
        %376 = vmatpush2.msra.mxu0 0.0
        %377 = vmatprep.subr.mxu0 0.0
        %378 = vmatpush2.msra.mxu0 0.0
        %379 = vmatprep.mubr.f32.mxu0 0.0
        %380 = vmatmul.mubr.f32.gmra.mxu0 %v203
        %v381 = vpop.f32.mrf.mxu0
        %v382 = vadd.f32 0.0, %v381
        %v383 = vpop.f32.mrf.mxu0
        %v384 = vadd.f32 0.0, %v383
        %385 = vmatprep.mubr.f32.mxu0 0.0
        %386 = vmatmul.mubr.f32.gmra.mxu0 %v204
        %v387 = vpop.f32.mrf.mxu0
        %v388 = vadd.f32 0.0, %v387
        %v389 = vpop.f32.mrf.mxu0
        %v390 = vadd.f32 0.0, %v389
        %391 = vmatprep.mubr.f32.mxu0 0.0
        %392 = vmatmul.mubr.f32.gmra.mxu0 %v205
        %v393 = vpop.f32.mrf.mxu0
        %v394 = vadd.f32 0.0, %v393
        %v395 = vpop.f32.mrf.mxu0
        %v396 = vadd.f32 0.0, %v395
        %397 = vmatprep.mubr.f32.mxu0 0.0
        %398 = vmatmul.mubr.f32.gmra.mxu0 %v206
        %v399 = vpop.f32.mrf.mxu0
        %v400 = vadd.f32 0.0, %v399
        %v401 = vpop.f32.mrf.mxu0
        %v402 = vadd.f32 0.0, %v401
        %403 = vmatprep.mubr.f32.mxu0 0.0
        %404 = vmatmul.mubr.f32.gmra.mxu0 %v207
        %v405 = vpop.f32.mrf.mxu0
        %v406 = vadd.f32 0.0, %v405
        %v407 = vpop.f32.mrf.mxu0
        %v408 = vadd.f32 0.0, %v407
        %409 = vmatprep.mubr.f32.mxu0 0.0
        %410 = vmatmul.mubr.f32.gmra.mxu0 %v208
        %v411 = vpop.f32.mrf.mxu0
        %v412 = vadd.f32 0.0, %v411
        %v413 = vpop.f32.mrf.mxu0
        %v414 = vadd.f32 0.0, %v413
        %415 = vmatprep.mubr.f32.mxu0 0.0
        %416 = vmatmul.mubr.f32.gmra.mxu0 %v209
        %v417 = vpop.f32.mrf.mxu0
        %v418 = vadd.f32 0.0, %v417
        %v419 = vpop.f32.mrf.mxu0
        %v420 = vadd.f32 0.0, %v419
        %421 = vmatprep.mubr.f32.mxu0 0.0
        %422 = vmatmul.mubr.f32.gmra.mxu0 %v210
        %v423 = vpop.f32.mrf.mxu0
        %v424 = vadd.f32 0.0, %v423
        %v425 = vpop.f32.mrf.mxu0
        %v426 = vadd.f32 0.0, %v425
        %427 = vmatprep.mubr.f32.mxu0 0.0
        %428 = vmatmul.mubr.f32.gmra.mxu0 %v211
        %v429 = vpop.f32.mrf.mxu0
        %v430 = vadd.f32 0.0, %v429
        %v431 = vpop.f32.mrf.mxu0
        %v432 = vadd.f32 0.0, %v431
        %433 = vmatprep.mubr.f32.mxu0 0.0
        %434 = vmatmul.mubr.f32.gmra.mxu0 %v212
        %v435 = vpop.f32.mrf.mxu0
        %v436 = vadd.f32 0.0, %v435
        %v437 = vpop.f32.mrf.mxu0
        %v438 = vadd.f32 0.0, %v437
        %439 = vmatprep.mubr.f32.mxu0 0.0
        %440 = vmatmul.mubr.f32.gmra.mxu0 %v213
        %v441 = vpop.f32.mrf.mxu0
        %v442 = vadd.f32 0.0, %v441
        %v443 = vpop.f32.mrf.mxu0
        %v444 = vadd.f32 0.0, %v443
        %445 = vmatprep.mubr.f32.mxu0 0.0
        %446 = vmatmul.mubr.f32.gmra.mxu0 %v214
        %v447 = vpop.f32.mrf.mxu0
        %v448 = vadd.f32 0.0, %v447
        %v449 = vpop.f32.mrf.mxu0
        %v450 = vadd.f32 0.0, %v449
        %451 = vmatprep.mubr.f32.mxu0 0.0
        %452 = vmatmul.mubr.f32.gmra.mxu0 %v215
        %v453 = vpop.f32.mrf.mxu0
        %v454 = vadd.f32 0.0, %v453
        %v455 = vpop.f32.mrf.mxu0
        %v456 = vadd.f32 0.0, %v455
        %457 = vmatprep.mubr.f32.mxu0 0.0
        %458 = vmatmul.mubr.f32.gmra.mxu0 %v216
        %v459 = vpop.f32.mrf.mxu0
        %v460 = vadd.f32 0.0, %v459
        %v461 = vpop.f32.mrf.mxu0
        %v462 = vadd.f32 0.0, %v461
        %463 = vmatprep.mubr.f32.mxu0 0.0
        %464 = vmatmul.mubr.f32.gmra.mxu0 %v217
        %v465 = vpop.f32.mrf.mxu0
        %v466 = vadd.f32 0.0, %v465
        %v467 = vpop.f32.mrf.mxu0
        %v468 = vadd.f32 0.0, %v467
        %469 = vmatprep.mubr.f32.mxu0 0.0
        %470 = vmatmul.mubr.f32.gmra.mxu0 %v218
        %v471 = vpop.f32.mrf.mxu0
        %v472 = vadd.f32 0.0, %v471
        %v473 = vpop.f32.mrf.mxu0
        %v474 = vadd.f32 0.0, %v473
        %475 = vmatprep.mubr.f32.mxu0 0.0
        %476 = vmatmul.mubr.f32.gmra.mxu0 %v219
        %v477 = vpop.f32.mrf.mxu0
        %v478 = vadd.f32 0.0, %v477
        %v479 = vpop.f32.mrf.mxu0
        %v480 = vadd.f32 0.0, %v479
        %481 = vmatprep.mubr.f32.mxu0 0.0
        %482 = vmatmul.mubr.f32.gmra.mxu0 %v220
        %v483 = vpop.f32.mrf.mxu0
        %v484 = vadd.f32 0.0, %v483
        %v485 = vpop.f32.mrf.mxu0
        %v486 = vadd.f32 0.0, %v485
        %487 = vmatprep.mubr.f32.mxu0 0.0
        %488 = vmatmul.mubr.f32.gmra.mxu0 %v221
        %v489 = vpop.f32.mrf.mxu0
        %v490 = vadd.f32 0.0, %v489
        %v491 = vpop.f32.mrf.mxu0
        %v492 = vadd.f32 0.0, %v491
        %493 = vmatprep.mubr.f32.mxu0 0.0
        %494 = vmatmul.mubr.f32.gmra.mxu0 %v222
        %v495 = vpop.f32.mrf.mxu0
        %v496 = vadd.f32 0.0, %v495
        %v497 = vpop.f32.mrf.mxu0
        %v498 = vadd.f32 0.0, %v497
        %499 = vmatprep.mubr.f32.mxu0 0.0
        %500 = vmatmul.mubr.f32.gmra.mxu0 %v223
        %v501 = vpop.f32.mrf.mxu0
        %v502 = vadd.f32 0.0, %v501
        %v503 = vpop.f32.mrf.mxu0
        %v504 = vadd.f32 0.0, %v503
        %505 = vmatprep.mubr.f32.mxu0 0.0
        %506 = vmatmul.mubr.f32.gmra.mxu0 %v224
        %v507 = vpop.f32.mrf.mxu0
        %v508 = vadd.f32 0.0, %v507
        %v509 = vpop.f32.mrf.mxu0
        %v510 = vadd.f32 0.0, %v509
        %511 = vmatprep.mubr.f32.mxu0 0.0
        %512 = vmatmul.mubr.f32.gmra.mxu0 %v225
        %v513 = vpop.f32.mrf.mxu0
        %v514 = vadd.f32 0.0, %v513
        %v515 = vpop.f32.mrf.mxu0
        %v516 = vadd.f32 0.0, %v515
        %517 = vmatprep.mubr.f32.mxu0 0.0
        %518 = vmatmul.mubr.f32.gmra.mxu0 %v226
        %v519 = vpop.f32.mrf.mxu0
        %v520 = vadd.f32 0.0, %v519
        %v521 = vpop.f32.mrf.mxu0
        %v522 = vadd.f32 0.0, %v521
        %523 = vmatprep.mubr.f32.mxu0 0.0
        %524 = vmatmul.mubr.f32.gmra.mxu0 %v227
        %v525 = vpop.f32.mrf.mxu0
        %v526 = vadd.f32 0.0, %v525
        %v527 = vpop.f32.mrf.mxu0
        %v528 = vadd.f32 0.0, %v527
        %529 = vmatprep.mubr.f32.mxu0 0.0
        %530 = vmatmul.mubr.f32.gmra.mxu0 %v228
        %v531 = vpop.f32.mrf.mxu0
        %v532 = vadd.f32 0.0, %v531
        %v533 = vpop.f32.mrf.mxu0
        %v534 = vadd.f32 0.0, %v533
        %535 = vmatprep.mubr.f32.mxu0 0.0
        %536 = vmatmul.mubr.f32.gmra.mxu0 %v229
        %v537 = vpop.f32.mrf.mxu0
        %v538 = vadd.f32 0.0, %v537
        %v539 = vpop.f32.mrf.mxu0
        %v540 = vadd.f32 0.0, %v539
        %541 = vmatprep.mubr.f32.mxu0 0.0
        %542 = vmatmul.mubr.f32.gmra.mxu0 %v230
        %v543 = vpop.f32.mrf.mxu0
        %v544 = vadd.f32 0.0, %v543
        %v545 = vpop.f32.mrf.mxu0
        %v546 = vadd.f32 0.0, %v545
        %547 = vmatprep.mubr.f32.mxu0 0.0
        %548 = vmatmul.mubr.f32.gmra.mxu0 %v231
        %v549 = vpop.f32.mrf.mxu0
        %v550 = vadd.f32 0.0, %v549
        %v551 = vpop.f32.mrf.mxu0
        %v552 = vadd.f32 0.0, %v551
        %553 = vmatprep.mubr.f32.mxu0 0.0
        %554 = vmatmul.mubr.f32.gmra.mxu0 %v232
        %v555 = vpop.f32.mrf.mxu0
        %v556 = vadd.f32 0.0, %v555
        %v557 = vpop.f32.mrf.mxu0
        %v558 = vadd.f32 0.0, %v557
        %559 = vmatprep.mubr.f32.mxu0 0.0
        %560 = vmatmul.mubr.f32.gmra.mxu0 %v233
        %v561 = vpop.f32.mrf.mxu0
        %v562 = vadd.f32 0.0, %v561
        %v563 = vpop.f32.mrf.mxu0
        %v564 = vadd.f32 0.0, %v563
        %565 = vmatprep.mubr.f32.mxu0 0.0
        %566 = vmatmul.mubr.f32.gmra.mxu0 %v234
        %v567 = vpop.f32.mrf.mxu0
        %v568 = vadd.f32 0.0, %v567
        %v569 = vpop.f32.mrf.mxu0
        %v570 = vadd.f32 0.0, %v569
        %571 = vmatprep.mubr.f32.mxu0 0.0
        %572 = vmatmul.mubr.f32.gmra.mxu0 %v235
        %v573 = vpop.f32.mrf.mxu0
        %v574 = vadd.f32 0.0, %v573
        %v575 = vpop.f32.mrf.mxu0
        %v576 = vadd.f32 0.0, %v575
        %577 = vmatprep.mubr.f32.mxu0 0.0
        %578 = vmatmul.mubr.f32.gmra.mxu0 %v236
        %v579 = vpop.f32.mrf.mxu0
        %v580 = vadd.f32 0.0, %v579
        %v581 = vpop.f32.mrf.mxu0
        %v582 = vadd.f32 0.0, %v581
        %583 = vmatprep.mubr.f32.mxu0 0.0
        %584 = vmatmul.mubr.f32.gmra.mxu0 %v237
        %v585 = vpop.f32.mrf.mxu0
        %v586 = vadd.f32 0.0, %v585
        %v587 = vpop.f32.mrf.mxu0
        %v588 = vadd.f32 0.0, %v587
        %589 = vmatprep.mubr.f32.mxu0 0.0
        %590 = vmatmul.mubr.f32.gmra.mxu0 %v238
        %v591 = vpop.f32.mrf.mxu0
        %v592 = vadd.f32 0.0, %v591
        %v593 = vpop.f32.mrf.mxu0
        %v594 = vadd.f32 0.0, %v593
        %595 = vmatprep.mubr.f32.mxu0 0.0
        %596 = vmatmul.mubr.f32.gmra.mxu0 %v239
        %v597 = vpop.f32.mrf.mxu0
        %v598 = vadd.f32 0.0, %v597
        %v599 = vpop.f32.mrf.mxu0
        %v600 = vadd.f32 0.0, %v599
        %601 = vmatprep.mubr.f32.mxu0 0.0
        %602 = vmatmul.mubr.f32.gmra.mxu0 %v240
        %v603 = vpop.f32.mrf.mxu0
        %v604 = vadd.f32 0.0, %v603
        %v605 = vpop.f32.mrf.mxu0
        %v606 = vadd.f32 0.0, %v605
        %607 = vmatprep.mubr.f32.mxu0 0.0
        %608 = vmatmul.mubr.f32.gmra.mxu0 %v241
        %v609 = vpop.f32.mrf.mxu0
        %v610 = vadd.f32 0.0, %v609
        %v611 = vpop.f32.mrf.mxu0
        %v612 = vadd.f32 0.0, %v611
        %613 = vmatprep.mubr.f32.mxu0 0.0
        %614 = vmatmul.mubr.f32.gmra.mxu0 %v242
        %v615 = vpop.f32.mrf.mxu0
        %v616 = vadd.f32 0.0, %v615
        %v617 = vpop.f32.mrf.mxu0
        %v618 = vadd.f32 0.0, %v617
        %619 = vmatprep.mubr.f32.mxu0 0.0
        %620 = vmatmul.mubr.f32.gmra.mxu0 %v243
        %v621 = vpop.f32.mrf.mxu0
        %v622 = vadd.f32 0.0, %v621
        %v623 = vpop.f32.mrf.mxu0
        %v624 = vadd.f32 0.0, %v623
        %625 = vmatprep.mubr.f32.mxu0 0.0
        %626 = vmatmul.mubr.f32.gmra.mxu0 %v244
        %v627 = vpop.f32.mrf.mxu0
        %v628 = vadd.f32 0.0, %v627
        %v629 = vpop.f32.mrf.mxu0
        %v630 = vadd.f32 0.0, %v629
        %631 = vmatprep.mubr.f32.mxu0 0.0
        %632 = vmatmul.mubr.f32.gmra.mxu0 %v245
        %v633 = vpop.f32.mrf.mxu0
        %v634 = vadd.f32 0.0, %v633
        %v635 = vpop.f32.mrf.mxu0
        %v636 = vadd.f32 0.0, %v635
        %637 = vmatprep.mubr.f32.mxu0 0.0
        %638 = vmatmul.mubr.f32.gmra.mxu0 %v246
        %v639 = vpop.f32.mrf.mxu0
        %v640 = vadd.f32 0.0, %v639
        %v641 = vpop.f32.mrf.mxu0
        %v642 = vadd.f32 0.0, %v641
        %643 = vmatprep.mubr.f32.mxu0 0.0
        %644 = vmatmul.mubr.f32.gmra.mxu0 %v247
        %v645 = vpop.f32.mrf.mxu0
        %v646 = vadd.f32 0.0, %v645
        %v647 = vpop.f32.mrf.mxu0
        %v648 = vadd.f32 0.0, %v647
        %649 = vmatprep.mubr.f32.mxu0 0.0
        %650 = vmatmul.mubr.f32.gmra.mxu0 %v248
        %v651 = vpop.f32.mrf.mxu0
        %v652 = vadd.f32 0.0, %v651
        %v653 = vpop.f32.mrf.mxu0
        %v654 = vadd.f32 0.0, %v653
        %655 = vmatprep.mubr.f32.mxu0 0.0
        %656 = vmatmul.mubr.f32.gmra.mxu0 %v249
        %v657 = vpop.f32.mrf.mxu0
        %v658 = vadd.f32 0.0, %v657
        %v659 = vpop.f32.mrf.mxu0
        %v660 = vadd.f32 0.0, %v659
        %661 = vmatprep.mubr.f32.mxu0 0.0
        %662 = vmatmul.mubr.f32.gmra.mxu0 %v250
        %v663 = vpop.f32.mrf.mxu0
        %v664 = vadd.f32 0.0, %v663
        %v665 = vpop.f32.mrf.mxu0
        %v666 = vadd.f32 0.0, %v665
        %667 = vmatprep.mubr.f32.mxu0 0.0
        %668 = vmatmul.mubr.f32.gmra.mxu0 %v251
        %v669 = vpop.f32.mrf.mxu0
        %v670 = vadd.f32 0.0, %v669
        %v671 = vpop.f32.mrf.mxu0
        %v672 = vadd.f32 0.0, %v671
        %673 = vmatprep.mubr.f32.mxu0 0.0
        %674 = vmatmul.mubr.f32.gmra.mxu0 %v252
        %v675 = vpop.f32.mrf.mxu0
        %v676 = vadd.f32 0.0, %v675
        %v677 = vpop.f32.mrf.mxu0
        %v678 = vadd.f32 0.0, %v677
        %679 = vmatprep.mubr.f32.mxu0 0.0
        %680 = vmatmul.mubr.f32.gmra.mxu0 %v253
        %v681 = vpop.f32.mrf.mxu0
        %v682 = vadd.f32 0.0, %v681
        %v683 = vpop.f32.mrf.mxu0
        %v684 = vadd.f32 0.0, %v683
        %685 = vmatprep.mubr.f32.mxu0 0.0
        %686 = vmatmul.mubr.f32.gmra.mxu0 %v254
        %v687 = vpop.f32.mrf.mxu0
        %v688 = vadd.f32 0.0, %v687
        %v689 = vpop.f32.mrf.mxu0
        %v690 = vadd.f32 0.0, %v689
        %691 = vmatprep.mubr.f32.mxu0 0.0
        %692 = vmatmul.mubr.f32.gmra.mxu0 %v255
        %v693 = vpop.f32.mrf.mxu0
        %v694 = vadd.f32 0.0, %v693
        %v695 = vpop.f32.mrf.mxu0
        %v696 = vadd.f32 0.0, %v695
        %697 = vmatprep.mubr.f32.mxu0 0.0
        %698 = vmatmul.mubr.f32.gmra.mxu0 %v256
        %v699 = vpop.f32.mrf.mxu0
        %v700 = vadd.f32 0.0, %v699
        %v701 = vpop.f32.mrf.mxu0
        %v702 = vadd.f32 0.0, %v701
        %703 = vmatprep.mubr.f32.mxu0 0.0
        %704 = vmatmul.mubr.f32.gmra.mxu0 %v257
        %v705 = vpop.f32.mrf.mxu0
        %v706 = vadd.f32 0.0, %v705
        %v707 = vpop.f32.mrf.mxu0
        %v708 = vadd.f32 0.0, %v707
        %709 = vmatprep.mubr.f32.mxu0 0.0
        %710 = vmatmul.mubr.f32.gmra.mxu0 %v258
        %v711 = vpop.f32.mrf.mxu0
        %v712 = vadd.f32 0.0, %v711
        %v713 = vpop.f32.mrf.mxu0
        %v714 = vadd.f32 0.0, %v713
        %715 = vmatprep.mubr.f32.mxu0 0.0
        %716 = vmatmul.mubr.f32.gmra.mxu0 %v259
        %v717 = vpop.f32.mrf.mxu0
        %v718 = vadd.f32 0.0, %v717
        %v719 = vpop.f32.mrf.mxu0
        %v720 = vadd.f32 0.0, %v719
        %721 = vmatprep.mubr.f32.mxu0 0.0
        %722 = vmatmul.mubr.f32.gmra.mxu0 %v260
        %v723 = vpop.f32.mrf.mxu0
        %v724 = vadd.f32 0.0, %v723
        %v725 = vpop.f32.mrf.mxu0
        %v726 = vadd.f32 0.0, %v725
        %727 = vmatprep.mubr.f32.mxu0 0.0
        %728 = vmatmul.mubr.f32.gmra.mxu0 %v261
        %v729 = vpop.f32.mrf.mxu0
        %v730 = vadd.f32 0.0, %v729
        %v731 = vpop.f32.mrf.mxu0
        %v732 = vadd.f32 0.0, %v731
        %733 = vmatprep.mubr.f32.mxu0 0.0
        %734 = vmatmul.mubr.f32.gmra.mxu0 %v262
        %v735 = vpop.f32.mrf.mxu0
        %v736 = vadd.f32 0.0, %v735
        %v737 = vpop.f32.mrf.mxu0
        %v738 = vadd.f32 0.0, %v737
        %739 = vmatprep.mubr.f32.mxu0 0.0
        %740 = vmatmul.mubr.f32.gmra.mxu0 %v263
        %v741 = vpop.f32.mrf.mxu0
        %v742 = vadd.f32 0.0, %v741
        %v743 = vpop.f32.mrf.mxu0
        %v744 = vadd.f32 0.0, %v743
        %745 = vmatprep.mubr.f32.mxu0 0.0
        %746 = vmatmul.mubr.f32.gmra.mxu0 %v264
        %v747 = vpop.f32.mrf.mxu0
        %v748 = vadd.f32 0.0, %v747
        %v749 = vpop.f32.mrf.mxu0
        %v750 = vadd.f32 0.0, %v749
        %751 = vmatprep.mubr.f32.mxu0 0.0
        %752 = vmatmul.mubr.f32.gmra.mxu0 %v265
        %v753 = vpop.f32.mrf.mxu0
        %v754 = vadd.f32 0.0, %v753
        %v755 = vpop.f32.mrf.mxu0
        %v756 = vadd.f32 0.0, %v755
        %757 = vmatprep.mubr.f32.mxu0 0.0
        %758 = vmatmul.mubr.f32.gmra.mxu0 %v266
        %v759 = vpop.f32.mrf.mxu0
        %v760 = vadd.f32 0.0, %v759
        %v761 = vpop.f32.mrf.mxu0
        %v762 = vadd.f32 0.0, %v761
        %763 = vdwg.mxu0
        %764 = vmatprep.subr.mxu0 0.0
        %765 = vmatpush1.msra.mxu0 %v314
        %766 = vmatprep.subr.mxu0 0.0
        %767 = vmatpush1.msra.mxu0 %v311
        %768 = vmatprep.subr.mxu0 0.0
        %769 = vmatpush1.msra.mxu0 %v308
        %770 = vmatprep.subr.mxu0 0.0
        %771 = vmatpush1.msra.mxu0 %v305
        %772 = vmatprep.subr.mxu0 0.0
        %773 = vmatpush1.msra.mxu0 %v302
        %774 = vmatprep.subr.mxu0 0.0
        %775 = vmatpush1.msra.mxu0 %v299
        %776 = vmatprep.subr.mxu0 0.0
        %777 = vmatpush1.msra.mxu0 %v296
        %778 = vmatprep.subr.mxu0 0.0
        %779 = vmatpush1.msra.mxu0 %v293
        %780 = vmatprep.subr.mxu0 0.0
        %781 = vmatpush1.msra.mxu0 %v290
        %782 = vmatprep.subr.mxu0 0.0
        %783 = vmatpush1.msra.mxu0 %v287
        %784 = vmatprep.subr.mxu0 0.0
        %785 = vmatpush1.msra.mxu0 %v284
        %786 = vmatprep.subr.mxu0 0.0
        %787 = vmatpush1.msra.mxu0 %v281
        %788 = vmatprep.subr.mxu0 0.0
        %789 = vmatpush1.msra.mxu0 %v278
        %790 = vmatprep.subr.mxu0 0.0
        %791 = vmatpush1.msra.mxu0 %v275
        %792 = vmatprep.subr.mxu0 0.0
        %793 = vmatpush1.msra.mxu0 %v272
        %794 = vmatprep.subr.mxu0 0.0
        %795 = vmatpush1.msra.mxu0 %v269
        %796 = vmatprep.subr.mxu0 0.0
        %797 = vmatpush2.msra.mxu0 0.0
        %798 = vmatprep.subr.mxu0 0.0
        %799 = vmatpush2.msra.mxu0 0.0
        %800 = vmatprep.subr.mxu0 0.0
        %801 = vmatpush2.msra.mxu0 0.0
        %802 = vmatprep.subr.mxu0 0.0
        %803 = vmatpush2.msra.mxu0 0.0
        %804 = vmatprep.subr.mxu0 0.0
        %805 = vmatpush2.msra.mxu0 0.0
        %806 = vmatprep.subr.mxu0 0.0
        %807 = vmatpush2.msra.mxu0 0.0
        %808 = vmatprep.subr.mxu0 0.0
        %809 = vmatpush2.msra.mxu0 0.0
        %810 = vmatprep.subr.mxu0 0.0
        %811 = vmatpush2.msra.mxu0 0.0
        %812 = vmatprep.subr.mxu0 0.0
        %813 = vmatpush2.msra.mxu0 0.0
        %814 = vmatprep.subr.mxu0 0.0
        %815 = vmatpush2.msra.mxu0 0.0
        %816 = vmatprep.subr.mxu0 0.0
        %817 = vmatpush2.msra.mxu0 0.0
        %818 = vmatprep.subr.mxu0 0.0
        %819 = vmatpush2.msra.mxu0 0.0
        %820 = vmatprep.subr.mxu0 0.0
        %821 = vmatpush2.msra.mxu0 0.0
        %822 = vmatprep.subr.mxu0 0.0
        %823 = vmatpush2.msra.mxu0 0.0
        %824 = vmatprep.subr.mxu0 0.0
        %825 = vmatpush2.msra.mxu0 0.0
        %826 = vmatprep.subr.mxu0 0.0
        %827 = vmatpush2.msra.mxu0 0.0
        %828 = vmatprep.mubr.f32.mxu0 0.0
        %829 = vmatmul.mubr.f32.gmra.mxu0 %v203
        %v830 = vpop.f32.mrf.mxu0
        %v831 = vadd.f32 0.0, %v830
        %v832 = vpop.f32.mrf.mxu0
        %833 = vmatprep.mubr.f32.mxu0 0.0
        %834 = vmatmul.mubr.f32.gmra.mxu0 %v204
        %v835 = vpop.f32.mrf.mxu0
        %v836 = vadd.f32 0.0, %v835
        %v837 = vpop.f32.mrf.mxu0
        %838 = vmatprep.mubr.f32.mxu0 0.0
        %839 = vmatmul.mubr.f32.gmra.mxu0 %v205
        %v840 = vpop.f32.mrf.mxu0
        %v841 = vadd.f32 0.0, %v840
        %v842 = vpop.f32.mrf.mxu0
        %843 = vmatprep.mubr.f32.mxu0 0.0
        %844 = vmatmul.mubr.f32.gmra.mxu0 %v206
        %v845 = vpop.f32.mrf.mxu0
        %v846 = vadd.f32 0.0, %v845
        %v847 = vpop.f32.mrf.mxu0
        %848 = vmatprep.mubr.f32.mxu0 0.0
        %849 = vmatmul.mubr.f32.gmra.mxu0 %v207
        %v850 = vpop.f32.mrf.mxu0
        %v851 = vadd.f32 0.0, %v850
        %v852 = vpop.f32.mrf.mxu0
        %853 = vmatprep.mubr.f32.mxu0 0.0
        %854 = vmatmul.mubr.f32.gmra.mxu0 %v208
        %v855 = vpop.f32.mrf.mxu0
        %v856 = vadd.f32 0.0, %v855
        %v857 = vpop.f32.mrf.mxu0
        %858 = vmatprep.mubr.f32.mxu0 0.0
        %859 = vmatmul.mubr.f32.gmra.mxu0 %v209
        %v860 = vpop.f32.mrf.mxu0
        %v861 = vadd.f32 0.0, %v860
        %v862 = vpop.f32.mrf.mxu0
        %863 = vmatprep.mubr.f32.mxu0 0.0
        %864 = vmatmul.mubr.f32.gmra.mxu0 %v210
        %v865 = vpop.f32.mrf.mxu0
        %v866 = vadd.f32 0.0, %v865
        %v867 = vpop.f32.mrf.mxu0
        %868 = vmatprep.mubr.f32.mxu0 0.0
        %869 = vmatmul.mubr.f32.gmra.mxu0 %v211
        %v870 = vpop.f32.mrf.mxu0
        %v871 = vadd.f32 0.0, %v870
        %v872 = vpop.f32.mrf.mxu0
        %873 = vmatprep.mubr.f32.mxu0 0.0
        %874 = vmatmul.mubr.f32.gmra.mxu0 %v212
        %v875 = vpop.f32.mrf.mxu0
        %v876 = vadd.f32 0.0, %v875
        %v877 = vpop.f32.mrf.mxu0
        %878 = vmatprep.mubr.f32.mxu0 0.0
        %879 = vmatmul.mubr.f32.gmra.mxu0 %v213
        %v880 = vpop.f32.mrf.mxu0
        %v881 = vadd.f32 0.0, %v880
        %v882 = vpop.f32.mrf.mxu0
        %883 = vmatprep.mubr.f32.mxu0 0.0
        %884 = vmatmul.mubr.f32.gmra.mxu0 %v214
        %v885 = vpop.f32.mrf.mxu0
        %v886 = vadd.f32 0.0, %v885
        %v887 = vpop.f32.mrf.mxu0
        %888 = vmatprep.mubr.f32.mxu0 0.0
        %889 = vmatmul.mubr.f32.gmra.mxu0 %v215
        %v890 = vpop.f32.mrf.mxu0
        %v891 = vadd.f32 0.0, %v890
        %v892 = vpop.f32.mrf.mxu0
        %893 = vmatprep.mubr.f32.mxu0 0.0
        %894 = vmatmul.mubr.f32.gmra.mxu0 %v216
        %v895 = vpop.f32.mrf.mxu0
        %v896 = vadd.f32 0.0, %v895
        %v897 = vpop.f32.mrf.mxu0
        %898 = vmatprep.mubr.f32.mxu0 0.0
        %899 = vmatmul.mubr.f32.gmra.mxu0 %v217
        %v900 = vpop.f32.mrf.mxu0
        %v901 = vadd.f32 0.0, %v900
        %v902 = vpop.f32.mrf.mxu0
        %903 = vmatprep.mubr.f32.mxu0 0.0
        %904 = vmatmul.mubr.f32.gmra.mxu0 %v218
        %v905 = vpop.f32.mrf.mxu0
        %v906 = vadd.f32 0.0, %v905
        %v907 = vpop.f32.mrf.mxu0
        %908 = vmatprep.mubr.f32.mxu0 0.0
        %909 = vmatmul.mubr.f32.gmra.mxu0 %v219
        %v910 = vpop.f32.mrf.mxu0
        %v911 = vadd.f32 0.0, %v910
        %v912 = vpop.f32.mrf.mxu0
        %913 = vmatprep.mubr.f32.mxu0 0.0
        %914 = vmatmul.mubr.f32.gmra.mxu0 %v220
        %v915 = vpop.f32.mrf.mxu0
        %v916 = vadd.f32 0.0, %v915
        %v917 = vpop.f32.mrf.mxu0
        %918 = vmatprep.mubr.f32.mxu0 0.0
        %919 = vmatmul.mubr.f32.gmra.mxu0 %v221
        %v920 = vpop.f32.mrf.mxu0
        %v921 = vadd.f32 0.0, %v920
        %v922 = vpop.f32.mrf.mxu0
        %923 = vmatprep.mubr.f32.mxu0 0.0
        %924 = vmatmul.mubr.f32.gmra.mxu0 %v222
        %v925 = vpop.f32.mrf.mxu0
        %v926 = vadd.f32 0.0, %v925
        %v927 = vpop.f32.mrf.mxu0
        %928 = vmatprep.mubr.f32.mxu0 0.0
        %929 = vmatmul.mubr.f32.gmra.mxu0 %v223
        %v930 = vpop.f32.mrf.mxu0
        %v931 = vadd.f32 0.0, %v930
        %v932 = vpop.f32.mrf.mxu0
        %933 = vmatprep.mubr.f32.mxu0 0.0
        %934 = vmatmul.mubr.f32.gmra.mxu0 %v224
        %v935 = vpop.f32.mrf.mxu0
        %v936 = vadd.f32 0.0, %v935
        %v937 = vpop.f32.mrf.mxu0
        %938 = vmatprep.mubr.f32.mxu0 0.0
        %939 = vmatmul.mubr.f32.gmra.mxu0 %v225
        %v940 = vpop.f32.mrf.mxu0
        %v941 = vadd.f32 0.0, %v940
        %v942 = vpop.f32.mrf.mxu0
        %943 = vmatprep.mubr.f32.mxu0 0.0
        %944 = vmatmul.mubr.f32.gmra.mxu0 %v226
        %v945 = vpop.f32.mrf.mxu0
        %v946 = vadd.f32 0.0, %v945
        %v947 = vpop.f32.mrf.mxu0
        %948 = vmatprep.mubr.f32.mxu0 0.0
        %949 = vmatmul.mubr.f32.gmra.mxu0 %v227
        %v950 = vpop.f32.mrf.mxu0
        %v951 = vadd.f32 0.0, %v950
        %v952 = vpop.f32.mrf.mxu0
        %953 = vmatprep.mubr.f32.mxu0 0.0
        %954 = vmatmul.mubr.f32.gmra.mxu0 %v228
        %v955 = vpop.f32.mrf.mxu0
        %v956 = vadd.f32 0.0, %v955
        %v957 = vpop.f32.mrf.mxu0
        %958 = vmatprep.mubr.f32.mxu0 0.0
        %959 = vmatmul.mubr.f32.gmra.mxu0 %v229
        %v960 = vpop.f32.mrf.mxu0
        %v961 = vadd.f32 0.0, %v960
        %v962 = vpop.f32.mrf.mxu0
        %963 = vmatprep.mubr.f32.mxu0 0.0
        %964 = vmatmul.mubr.f32.gmra.mxu0 %v230
        %v965 = vpop.f32.mrf.mxu0
        %v966 = vadd.f32 0.0, %v965
        %v967 = vpop.f32.mrf.mxu0
        %968 = vmatprep.mubr.f32.mxu0 0.0
        %969 = vmatmul.mubr.f32.gmra.mxu0 %v231
        %v970 = vpop.f32.mrf.mxu0
        %v971 = vadd.f32 0.0, %v970
        %v972 = vpop.f32.mrf.mxu0
        %973 = vmatprep.mubr.f32.mxu0 0.0
        %974 = vmatmul.mubr.f32.gmra.mxu0 %v232
        %v975 = vpop.f32.mrf.mxu0
        %v976 = vadd.f32 0.0, %v975
        %v977 = vpop.f32.mrf.mxu0
        %978 = vmatprep.mubr.f32.mxu0 0.0
        %979 = vmatmul.mubr.f32.gmra.mxu0 %v233
        %v980 = vpop.f32.mrf.mxu0
        %v981 = vadd.f32 0.0, %v980
        %v982 = vpop.f32.mrf.mxu0
        %983 = vmatprep.mubr.f32.mxu0 0.0
        %984 = vmatmul.mubr.f32.gmra.mxu0 %v234
        %v985 = vpop.f32.mrf.mxu0
        %v986 = vadd.f32 0.0, %v985
        %v987 = vpop.f32.mrf.mxu0
        %988 = vmatprep.mubr.f32.mxu0 0.0
        %989 = vmatmul.mubr.f32.gmra.mxu0 %v235
        %v990 = vpop.f32.mrf.mxu0
        %v991 = vadd.f32 0.0, %v990
        %v992 = vpop.f32.mrf.mxu0
        %993 = vmatprep.mubr.f32.mxu0 0.0
        %994 = vmatmul.mubr.f32.gmra.mxu0 %v236
        %v995 = vpop.f32.mrf.mxu0
        %v996 = vadd.f32 0.0, %v995
        %v997 = vpop.f32.mrf.mxu0
        %998 = vmatprep.mubr.f32.mxu0 0.0
        %999 = vmatmul.mubr.f32.gmra.mxu0 %v237
        %v1000 = vpop.f32.mrf.mxu0
        %v1001 = vadd.f32 0.0, %v1000
        %v1002 = vpop.f32.mrf.mxu0
        %1003 = vmatprep.mubr.f32.mxu0 0.0
        %1004 = vmatmul.mubr.f32.gmra.mxu0 %v238
        %v1005 = vpop.f32.mrf.mxu0
        %v1006 = vadd.f32 0.0, %v1005
        %v1007 = vpop.f32.mrf.mxu0
        %1008 = vmatprep.mubr.f32.mxu0 0.0
        %1009 = vmatmul.mubr.f32.gmra.mxu0 %v239
        %v1010 = vpop.f32.mrf.mxu0
        %v1011 = vadd.f32 0.0, %v1010
        %v1012 = vpop.f32.mrf.mxu0
        %1013 = vmatprep.mubr.f32.mxu0 0.0
        %1014 = vmatmul.mubr.f32.gmra.mxu0 %v240
        %v1015 = vpop.f32.mrf.mxu0
        %v1016 = vadd.f32 0.0, %v1015
        %v1017 = vpop.f32.mrf.mxu0
        %1018 = vmatprep.mubr.f32.mxu0 0.0
        %1019 = vmatmul.mubr.f32.gmra.mxu0 %v241
        %v1020 = vpop.f32.mrf.mxu0
        %v1021 = vadd.f32 0.0, %v1020
        %v1022 = vpop.f32.mrf.mxu0
        %1023 = vmatprep.mubr.f32.mxu0 0.0
        %1024 = vmatmul.mubr.f32.gmra.mxu0 %v242
        %v1025 = vpop.f32.mrf.mxu0
        %v1026 = vadd.f32 0.0, %v1025
        %v1027 = vpop.f32.mrf.mxu0
        %1028 = vmatprep.mubr.f32.mxu0 0.0
        %1029 = vmatmul.mubr.f32.gmra.mxu0 %v243
        %v1030 = vpop.f32.mrf.mxu0
        %v1031 = vadd.f32 0.0, %v1030
        %v1032 = vpop.f32.mrf.mxu0
        %1033 = vmatprep.mubr.f32.mxu0 0.0
        %1034 = vmatmul.mubr.f32.gmra.mxu0 %v244
        %v1035 = vpop.f32.mrf.mxu0
        %v1036 = vadd.f32 0.0, %v1035
        %v1037 = vpop.f32.mrf.mxu0
        %1038 = vmatprep.mubr.f32.mxu0 0.0
        %1039 = vmatmul.mubr.f32.gmra.mxu0 %v245
        %v1040 = vpop.f32.mrf.mxu0
        %v1041 = vadd.f32 0.0, %v1040
        %v1042 = vpop.f32.mrf.mxu0
        %1043 = vmatprep.mubr.f32.mxu0 0.0
        %1044 = vmatmul.mubr.f32.gmra.mxu0 %v246
        %v1045 = vpop.f32.mrf.mxu0
        %v1046 = vadd.f32 0.0, %v1045
        %v1047 = vpop.f32.mrf.mxu0
        %1048 = vmatprep.mubr.f32.mxu0 0.0
        %1049 = vmatmul.mubr.f32.gmra.mxu0 %v247
        %v1050 = vpop.f32.mrf.mxu0
        %v1051 = vadd.f32 0.0, %v1050
        %v1052 = vpop.f32.mrf.mxu0
        %1053 = vmatprep.mubr.f32.mxu0 0.0
        %1054 = vmatmul.mubr.f32.gmra.mxu0 %v248
        %v1055 = vpop.f32.mrf.mxu0
        %v1056 = vadd.f32 0.0, %v1055
        %v1057 = vpop.f32.mrf.mxu0
        %1058 = vmatprep.mubr.f32.mxu0 0.0
        %1059 = vmatmul.mubr.f32.gmra.mxu0 %v249
        %v1060 = vpop.f32.mrf.mxu0
        %v1061 = vadd.f32 0.0, %v1060
        %v1062 = vpop.f32.mrf.mxu0
        %1063 = vmatprep.mubr.f32.mxu0 0.0
        %1064 = vmatmul.mubr.f32.gmra.mxu0 %v250
        %v1065 = vpop.f32.mrf.mxu0
        %v1066 = vadd.f32 0.0, %v1065
        %v1067 = vpop.f32.mrf.mxu0
        %1068 = vmatprep.mubr.f32.mxu0 0.0
        %1069 = vmatmul.mubr.f32.gmra.mxu0 %v251
        %v1070 = vpop.f32.mrf.mxu0
        %v1071 = vadd.f32 0.0, %v1070
        %v1072 = vpop.f32.mrf.mxu0
        %1073 = vmatprep.mubr.f32.mxu0 0.0
        %1074 = vmatmul.mubr.f32.gmra.mxu0 %v252
        %v1075 = vpop.f32.mrf.mxu0
        %v1076 = vadd.f32 0.0, %v1075
        %v1077 = vpop.f32.mrf.mxu0
        %1078 = vmatprep.mubr.f32.mxu0 0.0
        %1079 = vmatmul.mubr.f32.gmra.mxu0 %v253
        %v1080 = vpop.f32.mrf.mxu0
        %v1081 = vadd.f32 0.0, %v1080
        %v1082 = vpop.f32.mrf.mxu0
        %1083 = vmatprep.mubr.f32.mxu0 0.0
        %1084 = vmatmul.mubr.f32.gmra.mxu0 %v254
        %v1085 = vpop.f32.mrf.mxu0
        %v1086 = vadd.f32 0.0, %v1085
        %v1087 = vpop.f32.mrf.mxu0
        %1088 = vmatprep.mubr.f32.mxu0 0.0
        %1089 = vmatmul.mubr.f32.gmra.mxu0 %v255
        %v1090 = vpop.f32.mrf.mxu0
        %v1091 = vadd.f32 0.0, %v1090
        %v1092 = vpop.f32.mrf.mxu0
        %1093 = vmatprep.mubr.f32.mxu0 0.0
        %1094 = vmatmul.mubr.f32.gmra.mxu0 %v256
        %v1095 = vpop.f32.mrf.mxu0
        %v1096 = vadd.f32 0.0, %v1095
        %v1097 = vpop.f32.mrf.mxu0
        %1098 = vmatprep.mubr.f32.mxu0 0.0
        %1099 = vmatmul.mubr.f32.gmra.mxu0 %v257
        %v1100 = vpop.f32.mrf.mxu0
        %v1101 = vadd.f32 0.0, %v1100
        %v1102 = vpop.f32.mrf.mxu0
        %1103 = vmatprep.mubr.f32.mxu0 0.0
        %1104 = vmatmul.mubr.f32.gmra.mxu0 %v258
        %v1105 = vpop.f32.mrf.mxu0
        %v1106 = vadd.f32 0.0, %v1105
        %v1107 = vpop.f32.mrf.mxu0
        %1108 = vmatprep.mubr.f32.mxu0 0.0
        %1109 = vmatmul.mubr.f32.gmra.mxu0 %v259
        %v1110 = vpop.f32.mrf.mxu0
        %v1111 = vadd.f32 0.0, %v1110
        %v1112 = vpop.f32.mrf.mxu0
        %1113 = vmatprep.mubr.f32.mxu0 0.0
        %1114 = vmatmul.mubr.f32.gmra.mxu0 %v260
        %v1115 = vpop.f32.mrf.mxu0
        %v1116 = vadd.f32 0.0, %v1115
        %v1117 = vpop.f32.mrf.mxu0
        %1118 = vmatprep.mubr.f32.mxu0 0.0
        %1119 = vmatmul.mubr.f32.gmra.mxu0 %v261
        %v1120 = vpop.f32.mrf.mxu0
        %v1121 = vadd.f32 0.0, %v1120
        %v1122 = vpop.f32.mrf.mxu0
        %1123 = vmatprep.mubr.f32.mxu0 0.0
        %1124 = vmatmul.mubr.f32.gmra.mxu0 %v262
        %v1125 = vpop.f32.mrf.mxu0
        %v1126 = vadd.f32 0.0, %v1125
        %v1127 = vpop.f32.mrf.mxu0
        %1128 = vmatprep.mubr.f32.mxu0 0.0
        %1129 = vmatmul.mubr.f32.gmra.mxu0 %v263
        %v1130 = vpop.f32.mrf.mxu0
        %v1131 = vadd.f32 0.0, %v1130
        %v1132 = vpop.f32.mrf.mxu0
        %1133 = vmatprep.mubr.f32.mxu0 0.0
        %1134 = vmatmul.mubr.f32.gmra.mxu0 %v264
        %v1135 = vpop.f32.mrf.mxu0
        %v1136 = vadd.f32 0.0, %v1135
        %v1137 = vpop.f32.mrf.mxu0
        %1138 = vmatprep.mubr.f32.mxu0 0.0
        %1139 = vmatmul.mubr.f32.gmra.mxu0 %v265
        %v1140 = vpop.f32.mrf.mxu0
        %v1141 = vadd.f32 0.0, %v1140
        %v1142 = vpop.f32.mrf.mxu0
        %1143 = vmatprep.mubr.f32.mxu0 0.0
        %1144 = vmatmul.mubr.f32.gmra.mxu0 %v266
        %v1145 = vpop.f32.mrf.mxu0
        %v1146 = vadd.f32 0.0, %v1145
        %v1147 = vpop.f32.mrf.mxu0
        %1148 = vdwg.mxu0
        %1149 = vst [vmem:[%s198] sm:$0xff] %v382
        %1150 = vst [vmem:[%s198 + $0x8] sm:$0xff] %v384
        %1151 = vst [vmem:[%s198 + $0x10] sm:$0xff] %v831
        %1152 = vst [vmem:[%s198 + $0x18] sm:$0xff] %v388
        %1153 = vst [vmem:[%s198 + $0x20] sm:$0xff] %v390
        %1154 = vst [vmem:[%s198 + $0x28] sm:$0xff] %v836
        %1155 = vst [vmem:[%s198 + $0x30] sm:$0xff] %v394
        %1156 = vst [vmem:[%s198 + $0x38] sm:$0xff] %v396
        %1157 = vst [vmem:[%s198 + $0x40] sm:$0xff] %v841
        %1158 = vst [vmem:[%s198 + $0x48] sm:$0xff] %v400
        %1159 = vst [vmem:[%s198 + $0x50] sm:$0xff] %v402
        %1160 = vst [vmem:[%s198 + $0x58] sm:$0xff] %v846
        %1161 = vst [vmem:[%s198 + $0x60] sm:$0xff] %v406
        %1162 = vst [vmem:[%s198 + $0x68] sm:$0xff] %v408
        %1163 = vst [vmem:[%s198 + $0x70] sm:$0xff] %v851
        %1164 = vst [vmem:[%s198 + $0x78] sm:$0xff] %v412
        %1165 = vst [vmem:[%s198 + $0x80] sm:$0xff] %v414
        %1166 = vst [vmem:[%s198 + $0x88] sm:$0xff] %v856
        %1167 = vst [vmem:[%s198 + $0x90] sm:$0xff] %v418
        %1168 = vst [vmem:[%s198 + $0x98] sm:$0xff] %v420
        %1169 = vst [vmem:[%s198 + $0xa0] sm:$0xff] %v861
        %1170 = vst [vmem:[%s198 + $0xa8] sm:$0xff] %v424
        %1171 = vst [vmem:[%s198 + $0xb0] sm:$0xff] %v426
        %1172 = vst [vmem:[%s198 + $0xb8] sm:$0xff] %v866
        %1173 = vst [vmem:[%s198 + $0xc0] sm:$0xff] %v430
        %1174 = vst [vmem:[%s198 + $0xc8] sm:$0xff] %v432
        %1175 = vst [vmem:[%s198 + $0xd0] sm:$0xff] %v871
        %1176 = vst [vmem:[%s198 + $0xd8] sm:$0xff] %v436
        %1177 = vst [vmem:[%s198 + $0xe0] sm:$0xff] %v438
        %1178 = vst [vmem:[%s198 + $0xe8] sm:$0xff] %v876
        %1179 = vst [vmem:[%s198 + $0xf0] sm:$0xff] %v442
        %1180 = vst [vmem:[%s198 + $0xf8] sm:$0xff] %v444
        %1181 = vst [vmem:[%s198 + $0x100] sm:$0xff] %v881
        %1182 = vst [vmem:[%s198 + $0x108] sm:$0xff] %v448
        %1183 = vst [vmem:[%s198 + $0x110] sm:$0xff] %v450
        %1184 = vst [vmem:[%s198 + $0x118] sm:$0xff] %v886
        %1185 = vst [vmem:[%s198 + $0x120] sm:$0xff] %v454
        %1186 = vst [vmem:[%s198 + $0x128] sm:$0xff] %v456
        %1187 = vst [vmem:[%s198 + $0x130] sm:$0xff] %v891
        %1188 = vst [vmem:[%s198 + $0x138] sm:$0xff] %v460
        %1189 = vst [vmem:[%s198 + $0x140] sm:$0xff] %v462
        %1190 = vst [vmem:[%s198 + $0x148] sm:$0xff] %v896
        %1191 = vst [vmem:[%s198 + $0x150] sm:$0xff] %v466
        %1192 = vst [vmem:[%s198 + $0x158] sm:$0xff] %v468
        %1193 = vst [vmem:[%s198 + $0x160] sm:$0xff] %v901
        %1194 = vst [vmem:[%s198 + $0x168] sm:$0xff] %v472
        %1195 = vst [vmem:[%s198 + $0x170] sm:$0xff] %v474
        %1196 = vst [vmem:[%s198 + $0x178] sm:$0xff] %v906
        %1197 = vst [vmem:[%s198 + $0x180] sm:$0xff] %v478
        %1198 = vst [vmem:[%s198 + $0x188] sm:$0xff] %v480
        %1199 = vst [vmem:[%s198 + $0x190] sm:$0xff] %v911
        %1200 = vst [vmem:[%s198 + $0x198] sm:$0xff] %v484
        %1201 = vst [vmem:[%s198 + $0x1a0] sm:$0xff] %v486
        %1202 = vst [vmem:[%s198 + $0x1a8] sm:$0xff] %v916
        %1203 = vst [vmem:[%s198 + $0x1b0] sm:$0xff] %v490
        %1204 = vst [vmem:[%s198 + $0x1b8] sm:$0xff] %v492
        %1205 = vst [vmem:[%s198 + $0x1c0] sm:$0xff] %v921
        %1206 = vst [vmem:[%s198 + $0x1c8] sm:$0xff] %v496
        %1207 = vst [vmem:[%s198 + $0x1d0] sm:$0xff] %v498
        %1208 = vst [vmem:[%s198 + $0x1d8] sm:$0xff] %v926
        %1209 = vst [vmem:[%s198 + $0x1e0] sm:$0xff] %v502
        %1210 = vst [vmem:[%s198 + $0x1e8] sm:$0xff] %v504
        %1211 = vst [vmem:[%s198 + $0x1f0] sm:$0xff] %v931
        %1212 = vst [vmem:[%s198 + $0x1f8] sm:$0xff] %v508
        %1213 = vst [vmem:[%s198 + $0x200] sm:$0xff] %v510
        %1214 = vst [vmem:[%s198 + $0x208] sm:$0xff] %v936
        %1215 = vst [vmem:[%s198 + $0x210] sm:$0xff] %v514
        %1216 = vst [vmem:[%s198 + $0x218] sm:$0xff] %v516
        %1217 = vst [vmem:[%s198 + $0x220] sm:$0xff] %v941
        %1218 = vst [vmem:[%s198 + $0x228] sm:$0xff] %v520
        %1219 = vst [vmem:[%s198 + $0x230] sm:$0xff] %v522
        %1220 = vst [vmem:[%s198 + $0x238] sm:$0xff] %v946
        %1221 = vst [vmem:[%s198 + $0x240] sm:$0xff] %v526
        %1222 = vst [vmem:[%s198 + $0x248] sm:$0xff] %v528
        %1223 = vst [vmem:[%s198 + $0x250] sm:$0xff] %v951
        %1224 = vst [vmem:[%s198 + $0x258] sm:$0xff] %v532
        %1225 = vst [vmem:[%s198 + $0x260] sm:$0xff] %v534
        %1226 = vst [vmem:[%s198 + $0x268] sm:$0xff] %v956
        %1227 = vst [vmem:[%s198 + $0x270] sm:$0xff] %v538
        %1228 = vst [vmem:[%s198 + $0x278] sm:$0xff] %v540
        %1229 = vst [vmem:[%s198 + $0x280] sm:$0xff] %v961
        %1230 = vst [vmem:[%s198 + $0x288] sm:$0xff] %v544
        %1231 = vst [vmem:[%s198 + $0x290] sm:$0xff] %v546
        %1232 = vst [vmem:[%s198 + $0x298] sm:$0xff] %v966
        %1233 = vst [vmem:[%s198 + $0x2a0] sm:$0xff] %v550
        %1234 = vst [vmem:[%s198 + $0x2a8] sm:$0xff] %v552
        %1235 = vst [vmem:[%s198 + $0x2b0] sm:$0xff] %v971
        %1236 = vst [vmem:[%s198 + $0x2b8] sm:$0xff] %v556
        %1237 = vst [vmem:[%s198 + $0x2c0] sm:$0xff] %v558
        %1238 = vst [vmem:[%s198 + $0x2c8] sm:$0xff] %v976
        %1239 = vst [vmem:[%s198 + $0x2d0] sm:$0xff] %v562
        %1240 = vst [vmem:[%s198 + $0x2d8] sm:$0xff] %v564
        %1241 = vst [vmem:[%s198 + $0x2e0] sm:$0xff] %v981
        %1242 = vst [vmem:[%s198 + $0x2e8] sm:$0xff] %v568
        %1243 = vst [vmem:[%s198 + $0x2f0] sm:$0xff] %v570
        %1244 = vst [vmem:[%s198 + $0x2f8] sm:$0xff] %v986
        %1245 = vst [vmem:[%s198 + $0x300] sm:$0xff] %v574
        %1246 = vst [vmem:[%s198 + $0x308] sm:$0xff] %v576
        %1247 = vst [vmem:[%s198 + $0x310] sm:$0xff] %v991
        %1248 = vst [vmem:[%s198 + $0x318] sm:$0xff] %v580
        %1249 = vst [vmem:[%s198 + $0x320] sm:$0xff] %v582
        %1250 = vst [vmem:[%s198 + $0x328] sm:$0xff] %v996
        %1251 = vst [vmem:[%s198 + $0x330] sm:$0xff] %v586
        %1252 = vst [vmem:[%s198 + $0x338] sm:$0xff] %v588
        %1253 = vst [vmem:[%s198 + $0x340] sm:$0xff] %v1001
        %1254 = vst [vmem:[%s198 + $0x348] sm:$0xff] %v592
        %1255 = vst [vmem:[%s198 + $0x350] sm:$0xff] %v594
        %1256 = vst [vmem:[%s198 + $0x358] sm:$0xff] %v1006
        %1257 = vst [vmem:[%s198 + $0x360] sm:$0xff] %v598
        %1258 = vst [vmem:[%s198 + $0x368] sm:$0xff] %v600
        %1259 = vst [vmem:[%s198 + $0x370] sm:$0xff] %v1011
        %1260 = vst [vmem:[%s198 + $0x378] sm:$0xff] %v604
        %1261 = vst [vmem:[%s198 + $0x380] sm:$0xff] %v606
        %1262 = vst [vmem:[%s198 + $0x388] sm:$0xff] %v1016
        %1263 = vst [vmem:[%s198 + $0x390] sm:$0xff] %v610
        %1264 = vst [vmem:[%s198 + $0x398] sm:$0xff] %v612
        %1265 = vst [vmem:[%s198 + $0x3a0] sm:$0xff] %v1021
        %1266 = vst [vmem:[%s198 + $0x3a8] sm:$0xff] %v616
        %1267 = vst [vmem:[%s198 + $0x3b0] sm:$0xff] %v618
        %1268 = vst [vmem:[%s198 + $0x3b8] sm:$0xff] %v1026
        %1269 = vst [vmem:[%s198 + $0x3c0] sm:$0xff] %v622
        %1270 = vst [vmem:[%s198 + $0x3c8] sm:$0xff] %v624
        %1271 = vst [vmem:[%s198 + $0x3d0] sm:$0xff] %v1031
        %1272 = vst [vmem:[%s198 + $0x3d8] sm:$0xff] %v628
        %1273 = vst [vmem:[%s198 + $0x3e0] sm:$0xff] %v630
        %1274 = vst [vmem:[%s198 + $0x3e8] sm:$0xff] %v1036
        %1275 = vst [vmem:[%s198 + $0x3f0] sm:$0xff] %v634
        %1276 = vst [vmem:[%s198 + $0x3f8] sm:$0xff] %v636
        %1277 = vst [vmem:[%s198 + $0x400] sm:$0xff] %v1041
        %1278 = vst [vmem:[%s198 + $0x408] sm:$0xff] %v640
        %1279 = vst [vmem:[%s198 + $0x410] sm:$0xff] %v642
        %1280 = vst [vmem:[%s198 + $0x418] sm:$0xff] %v1046
        %1281 = vst [vmem:[%s198 + $0x420] sm:$0xff] %v646
        %1282 = vst [vmem:[%s198 + $0x428] sm:$0xff] %v648
        %1283 = vst [vmem:[%s198 + $0x430] sm:$0xff] %v1051
        %1284 = vst [vmem:[%s198 + $0x438] sm:$0xff] %v652
        %1285 = vst [vmem:[%s198 + $0x440] sm:$0xff] %v654
        %1286 = vst [vmem:[%s198 + $0x448] sm:$0xff] %v1056
        %1287 = vst [vmem:[%s198 + $0x450] sm:$0xff] %v658
        %1288 = vst [vmem:[%s198 + $0x458] sm:$0xff] %v660
        %1289 = vst [vmem:[%s198 + $0x460] sm:$0xff] %v1061
        %1290 = vst [vmem:[%s198 + $0x468] sm:$0xff] %v664
        %1291 = vst [vmem:[%s198 + $0x470] sm:$0xff] %v666
        %1292 = vst [vmem:[%s198 + $0x478] sm:$0xff] %v1066
        %1293 = vst [vmem:[%s198 + $0x480] sm:$0xff] %v670
        %1294 = vst [vmem:[%s198 + $0x488] sm:$0xff] %v672
        %1295 = vst [vmem:[%s198 + $0x490] sm:$0xff] %v1071
        %1296 = vst [vmem:[%s198 + $0x498] sm:$0xff] %v676
        %1297 = vst [vmem:[%s198 + $0x4a0] sm:$0xff] %v678
        %1298 = vst [vmem:[%s198 + $0x4a8] sm:$0xff] %v1076
        %1299 = vst [vmem:[%s198 + $0x4b0] sm:$0xff] %v682
        %1300 = vst [vmem:[%s198 + $0x4b8] sm:$0xff] %v684
        %1301 = vst [vmem:[%s198 + $0x4c0] sm:$0xff] %v1081
        %1302 = vst [vmem:[%s198 + $0x4c8] sm:$0xff] %v688
        %1303 = vst [vmem:[%s198 + $0x4d0] sm:$0xff] %v690
        %1304 = vst [vmem:[%s198 + $0x4d8] sm:$0xff] %v1086
        %1305 = vst [vmem:[%s198 + $0x4e0] sm:$0xff] %v694
        %1306 = vst [vmem:[%s198 + $0x4e8] sm:$0xff] %v696
        %1307 = vst [vmem:[%s198 + $0x4f0] sm:$0xff] %v1091
        %1308 = vst [vmem:[%s198 + $0x4f8] sm:$0xff] %v700
        %1309 = vst [vmem:[%s198 + $0x500] sm:$0xff] %v702
        %1310 = vst [vmem:[%s198 + $0x508] sm:$0xff] %v1096
        %1311 = vst [vmem:[%s198 + $0x510] sm:$0xff] %v706
        %1312 = vst [vmem:[%s198 + $0x518] sm:$0xff] %v708
        %1313 = vst [vmem:[%s198 + $0x520] sm:$0xff] %v1101
        %1314 = vst [vmem:[%s198 + $0x528] sm:$0xff] %v712
        %1315 = vst [vmem:[%s198 + $0x530] sm:$0xff] %v714
        %1316 = vst [vmem:[%s198 + $0x538] sm:$0xff] %v1106
        %1317 = vst [vmem:[%s198 + $0x540] sm:$0xff] %v718
        %1318 = vst [vmem:[%s198 + $0x548] sm:$0xff] %v720
        %1319 = vst [vmem:[%s198 + $0x550] sm:$0xff] %v1111
        %1320 = vst [vmem:[%s198 + $0x558] sm:$0xff] %v724
        %1321 = vst [vmem:[%s198 + $0x560] sm:$0xff] %v726
        %1322 = vst [vmem:[%s198 + $0x568] sm:$0xff] %v1116
        %1323 = vst [vmem:[%s198 + $0x570] sm:$0xff] %v730
        %1324 = vst [vmem:[%s198 + $0x578] sm:$0xff] %v732
        %1325 = vst [vmem:[%s198 + $0x580] sm:$0xff] %v1121
        %1326 = vst [vmem:[%s198 + $0x588] sm:$0xff] %v736
        %1327 = vst [vmem:[%s198 + $0x590] sm:$0xff] %v738
        %1328 = vst [vmem:[%s198 + $0x598] sm:$0xff] %v1126
        %1329 = vst [vmem:[%s198 + $0x5a0] sm:$0xff] %v742
        %1330 = vst [vmem:[%s198 + $0x5a8] sm:$0xff] %v744
        %1331 = vst [vmem:[%s198 + $0x5b0] sm:$0xff] %v1131
        %1332 = vst [vmem:[%s198 + $0x5b8] sm:$0xff] %v748
        %1333 = vst [vmem:[%s198 + $0x5c0] sm:$0xff] %v750
        %1334 = vst [vmem:[%s198 + $0x5c8] sm:$0xff] %v1136
        %1335 = vst [vmem:[%s198 + $0x5d0] sm:$0xff] %v754
        %1336 = vst [vmem:[%s198 + $0x5d8] sm:$0xff] %v756
        %1337 = vst [vmem:[%s198 + $0x5e0] sm:$0xff] %v1141
        %1338 = vst [vmem:[%s198 + $0x5e8] sm:$0xff] %v760
        %1339 = vst [vmem:[%s198 + $0x5f0] sm:$0xff] %v762
        %1340 = vst [vmem:[%s198 + $0x5f8] sm:$0xff] %v1146
        %s1341 = sand.u32 %s94, 1
        %s1342 = scalar_lea.sflag [#allocation4], %s1341
        %s1343 = sand.u32 %s94, 1
        %s1344 = smul.addr %s1343, 1536
        %s1345 = scalar_lea.vmem [#allocation7], %s1344
        // Predicated region
        $region37: #{tpu_custom_call.1} parent=27 // pred_check
          %p1346 = pneg %p104
        $region38: #{tpu_custom_call.1} parent=27 // pred_check_branch
          %1348 = sbr.rel (%p1346) target = $region40
        $region39: #{tpu_custom_call.1} parent=27 // pred_region
          %s1349 = smul.u32 64, %s24
          %s1350 = smul.u32 3, %s25
          %s1352 = ssub.s32 24576, 24576
          %1353 = vsyncadd %s1342, %s1352
          %s1354 = smul.addr %s1349, 6
          %s1355 = sadd.s32 %s1350, %s1354
          %s1356 = smul.addr %s1355, 128
          %s1357 = scalar_lea.hbm %s2, %s1356
          %s1358 = sshll.u32 %s1345, 4
          %s1359 = int_to_ptr.vmem [resolvable:$true] %s1358
          %1364 = dma.vmem_to_hbm [thread:$0]  %s1359, 24576, %s1357, %s1342, 384, 768, 24
        $region40: #{tpu_custom_call.1} parent=27 // pred_fallthru
          _
      $region28: #{tpu_custom_call.1} parent=5 // pred_fallthru
        _
      %p1365 = scmp.le.s32.totalorder 2, %s15
      // Predicated region
      $region41: #{tpu_custom_call.1} parent=5 // pred_check
        %p1366 = pneg %p1365
      $region42: #{tpu_custom_call.1} parent=5 // pred_check_branch
        %1368 = sbr.rel (%p1366) target = $region44
      $region43: #{tpu_custom_call.1} parent=5 // pred_region
        %s1369 = ssub.s32 %s15, 2
        // Predicated region
        $region45: #{tpu_custom_call.1} parent=43 // pred_check
          %p1370 = pneg %p110
        $region46: #{tpu_custom_call.1} parent=43 // pred_check_branch
          %1372 = sbr.rel (%p1370) target = $region48
        $region47: #{tpu_custom_call.1} parent=43 // pred_region
          %s1373 = sand.u32 %s95, 1
          %s1374 = scalar_lea.sflag [#allocation4], %s1373
          %s1375 = sand.u32 %s95, 1
          %s1376 = smul.addr %s1375, 1536
          %s1377 = scalar_lea.vmem [#allocation7], %s1376
          %1378 = dma.done %s1374, 24576
        $region48: #{tpu_custom_call.1} parent=43 // pred_fallthru
          _
      $region44: #{tpu_custom_call.1} parent=5 // pred_fallthru
        _
    $region6: #{tpu_custom_call.1} parent=1 // loop_footer
      %s19 = sadd.s32 1, %s15
    $region7: #{tpu_custom_call.1} parent=1 // loop_footer_branch
      %14 = sbr.rel target = $region3
    $region8: #{tpu_custom_call.1} parent=1 // loop_exit
      _
    %1379 = vsyncpa [#allocation3], 1
    %s1380 = scalar_lea.sflag [#allocation3], 1
    %1381 = vsyncpa %s1380, 1
    %1382 = vsyncpa [#allocation6], 1
    %s1383 = scalar_lea.sflag [#allocation6], 1
    %1384 = vsyncpa %s1383, 1
    %1385 = vsyncpa [#allocation4], 1
    %s1386 = scalar_lea.sflag [#allocation4], 1
    %1387 = vsyncpa %s1386, 1

</llo_original>
